<compile_context>
chip_gen: v7x
topology: tpu7x:2x2x1
jax: 0.10.0
libtpu: 0.0.40
codegen_flags: <defaults>
</compile_context>

<pallas_src>
import functools
import math

import numpy as np
import jax
import jax.numpy as jnp
from jax import lax
from jax.experimental import pallas as pl
from jax.experimental.pallas import tpu as pltpu


# ---------------------------------------------------------------------------
# Fused Pallas kernel: grid = (sample n, position tile j)
# ---------------------------------------------------------------------------

def _conv2plus1d_kernel(x_ref, wt_ref, bnb_ref, wxy_ref, mask_ref, o_ref,
                        xpad_ref, xcol_ref, mid_ref, mcol_ref, *,
                        W, HW, kt, kh, kw, TR, spad, tpad):
    """conv_t(kt,1,1) -> folded BN -> ReLU -> conv_xy(1,kh,kw) for one (Cout, TR) output tile."""
    Cin = x_ref.shape[0]
    Cmid = wt_ref.shape[0]
    pt, ph, pw = kt // 2, kh // 2, kw // 2
    sp_t = spad + tpad              # per-side halo staged around the tile (spatial + temporal)
    ML = TR + 2 * spad              # extended (spatially haloed) mid length
    bf16 = jnp.bfloat16

    j = pl.program_id(1)
    nj = pl.num_programs(1)
    tile0 = j * TR
    if TR % 128 == 0:
        tile0 = pl.multiple_of(tile0, 128)

    # ---- stage x (cast once f32 -> bf16) into a zero-halo scratch covering flat positions
    #      [j*TR - sp_t, j*TR + TR + sp_t); every region is written every step (megacore-safe) ----
    @pl.when(j == 0)
    def _():
        xpad_ref[:, :sp_t] = jnp.zeros((Cin, sp_t), bf16)

    @pl.when(j > 0)
    def _():
        ls = j * TR - sp_t
        if TR % 128 == 0 and sp_t % 128 == 0:
            ls = pl.multiple_of(ls, 128)
        xpad_ref[:, :sp_t] = x_ref[:, pl.ds(ls, sp_t)].astype(bf16)

    xpad_ref[:, sp_t:sp_t + TR] = x_ref[:, pl.ds(tile0, TR)].astype(bf16)

    @pl.when(j == nj - 1)
    def _():
        xpad_ref[:, sp_t + TR:] = jnp.zeros((Cin, sp_t), bf16)

    @pl.when(j < nj - 1)
    def _():
        rs = (j + 1) * TR
        if TR % 128 == 0:
            rs = pl.multiple_of(rs, 128)
        xpad_ref[:, sp_t + TR:] = x_ref[:, pl.ds(rs, sp_t)].astype(bf16)

    # ---- temporal im2col: kt frame-shifted slices (offsets are multiples of HW -> lane-aligned),
    #      then ONE MXU dot with K = kt*Cin; BN scale is pre-folded into wt ----
    for dt in range(kt):
        off = tpad + (dt - pt) * HW                       # static, in [0, 2*tpad]
        xcol_ref[dt * Cin:(dt + 1) * Cin, :] = xpad_ref[:, off:off + ML]

    mid = jnp.dot(wt_ref[...], xcol_ref[...], preferred_element_type=jnp.float32)   # (Cmid, ML) f32
    mid_ref[...] = jnp.maximum(mid + bnb_ref[...], 0.0).astype(bf16)                # shift + ReLU, round once

    # ---- spatial im2col: kh*kw shifted slices of mid with the H/W border mask (precomputed 0/1
    #      bf16) fused into the staging copy, then ONE MXU dot with K = kh*kw*Cmid ----
    for dh in range(kh):
        for dw in range(kw):
            idx = dh * kw + dw
            off = (dh - ph) * W + (dw - pw)               # |off| <= spad
            tap = mid_ref[:, spad + off: spad + off + TR]                            # (Cmid, TR) bf16
            if dh != ph or dw != pw:
                tap = tap * mask_ref[idx:idx + 1, :]      # zero taps that cross H/W borders
            mcol_ref[idx * Cmid:(idx + 1) * Cmid, :] = tap

    out = jnp.dot(wxy_ref[...], mcol_ref[...], preferred_element_type=jnp.float32)   # (Cout, TR) f32
    o_ref[...] = out.astype(o_ref.dtype)                  # lane-dense store (TR multiple of 128)


def _pick_tile(R, sp_t):
    for c in (512, 1024, 256, 128):
        if R % c == 0 and c % 128 == 0 and sp_t <= c:
            return c
    return R


# ---------------------------------------------------------------------------
# Wrapper
# ---------------------------------------------------------------------------

def conv2plus1d_forward(x, params, *, kt=3, kh=3, kw=3):
    """x: (N, C, T, H, W) float32 (NCTHW, like the PyTorch module). Returns (N, Cout, T, H, W)."""
    wt, bnb, wxy = params                       # (Cmid, kt*Cin) bf16, (Cmid,1) f32, (Cout, kh*kw*Cmid) bf16
    N, Cin, T, H, W = x.shape
    Cmid, ktCin = wt.shape
    Cout, khwCmid = wxy.shape
    assert ktCin == kt * Cin and khwCmid == kh * kw * Cmid
    assert kt % 2 == 1 and kh % 2 == 1 and kw % 2 == 1, "stride-1 'same'-padded convs only"
    HW, R = H * W, T * H * W
    pt, ph, pw = kt // 2, kh // 2, kw // 2
    SH = ph * W + pw
    spad = max(128, ((SH + 127) // 128) * 128)  # lane-aligned spatial halo (>= kh//2*W + kw//2)
    tpad = pt * HW                              # temporal halo (whole frames)
    sp_t = spad + tpad
    TR = _pick_tile(R, sp_t)                    # position-tile size (second, parallel grid axis)
    nj = R // TR
    assert nj == 1 or sp_t <= TR, "halo must fit within one neighboring tile"

    # precomputed 0/1 H/W-border mask, (kh*kw, R) bf16, sliced per tile by BlockSpec
    pcoord = np.arange(R, dtype=np.int64)
    hcoord = (pcoord // W) % H
    wcoord = pcoord % W
    rows = []
    for dh in range(kh):
        for dw in range(kw):
            hh = hcoord + (dh - ph)
            ww = wcoord + (dw - pw)
            rows.append(((hh >= 0) & (hh < H) & (ww >= 0) & (ww < W)).astype(np.float32))
    mask = jnp.asarray(np.stack(rows, 0), dtype=jnp.bfloat16)

    kernel = functools.partial(_conv2plus1d_kernel, W=W, HW=HW, kt=kt, kh=kh, kw=kw,
                               TR=TR, spad=spad, tpad=tpad)
    flops = 2 * N * R * (kt * Cin * Cmid + kh * kw * Cmid * Cout)
    bytes_accessed = 4 * N * R * (Cin + Cout) + 2 * (wt.size + wxy.size) + 4 * bnb.size + 2 * N * mask.size

    out_flat = pl.pallas_call(
        kernel,
        out_shape=jax.ShapeDtypeStruct((N, Cout, R), jnp.float32),
        grid=(N, nj),
        in_specs=[
            pl.BlockSpec((None, Cin, R), lambda n, j: (n, 0, 0)),        # full sample; DMA'd once per n
            pl.BlockSpec((Cmid, kt * Cin), lambda n, j: (0, 0)),         # packed conv_t weight (resident)
            pl.BlockSpec((Cmid, 1), lambda n, j: (0, 0)),                # folded BN shift (resident)
            pl.BlockSpec((Cout, kh * kw * Cmid), lambda n, j: (0, 0)),   # packed conv_xy weight (resident)
            pl.BlockSpec((kh * kw, TR), lambda n, j: (0, j)),            # border-mask tile
        ],
        out_specs=pl.BlockSpec((None, Cout, TR), lambda n, j: (n, 0, j)),
        scratch_shapes=[
            pltpu.VMEM((Cin, TR + 2 * sp_t), jnp.bfloat16),              # zero-haloed x tile (bf16)
            pltpu.VMEM((kt * Cin, TR + 2 * spad), jnp.bfloat16),         # temporal im2col
            pltpu.VMEM((Cmid, TR + 2 * spad), jnp.bfloat16),             # haloed mid (post BN+ReLU)
            pltpu.VMEM((kh * kw * Cmid, TR), jnp.bfloat16),              # spatial im2col
        ],
        compiler_params=pltpu.CompilerParams(
            dimension_semantics=("parallel", "parallel")),
        cost_estimate=pl.CostEstimate(flops=flops, transcendentals=0,
                                      bytes_accessed=bytes_accessed),
    )(x.reshape(N, Cin, R), wt, bnb, wxy, mask)  # reshape of contiguous NCTHW: free, no transpose
    return out_flat.reshape(N, Cout, T, H, W)


# ---------------------------------------------------------------------------
# Parameters (Conv3d bias=False, eval-mode BatchNorm3d folded, ReLU) + pure-JAX reference
# ---------------------------------------------------------------------------

def init_conv2plus1d_params(key, Cin, Cmid, Cout, *, kt=3, kh=3, kw=3, bn_eps=1e-5):
    k_wt, k_g, k_b, k_m, k_v, k_wxy = jax.random.split(key, 6)
    # conv_t weight, PyTorch layout (Cmid, Cin, kt[,1,1]); BN scale folded in exactly
    wt = math.sqrt(2.0 / (Cin * kt)) * jax.random.normal(k_wt, (Cmid, Cin, kt), jnp.float32)
    gamma = 1.0 + 0.1 * jax.random.normal(k_g, (Cmid,), jnp.float32)
    beta = 0.1 * jax.random.normal(k_b, (Cmid,), jnp.float32)
    running_mean = 0.1 * jax.random.normal(k_m, (Cmid,), jnp.float32)
    running_var = jnp.abs(1.0 + 0.1 * jax.random.normal(k_v, (Cmid,), jnp.float32))
    scale = gamma / jnp.sqrt(running_var + bn_eps)
    shift = beta - running_mean * scale
    # im2col packing: (Cmid, Cin, kt) -> (Cmid, kt, Cin) -> (Cmid, kt*Cin)
    wt_packed = jnp.transpose(wt * scale[:, None, None], (0, 2, 1)).reshape(Cmid, kt * Cin)
    wt_packed = wt_packed.astype(jnp.bfloat16)
    bn_shift = shift.reshape(Cmid, 1).astype(jnp.float32)
    # conv_xy weight, PyTorch layout (Cout, Cmid, 1, kh, kw) -> (Cout, kh, kw, Cmid) -> (Cout, kh*kw*Cmid)
    wxy = math.sqrt(2.0 / (Cmid * kh * kw)) * jax.random.normal(
        k_wxy, (Cout, Cmid, kh, kw), jnp.float32)
    wxy_packed = jnp.transpose(wxy, (0, 2, 3, 1)).reshape(Cout, kh * kw * Cmid).astype(jnp.bfloat16)
    return wt_packed, bn_shift, wxy_packed


def conv2plus1d_reference(x, params, *, kt=3, kh=3, kw=3):
    """Pure-JAX (lax conv) reference, mirroring the kernel's bf16 operand rounding."""
    wt_packed, bn_shift, wxy_packed = params
    Cmid = wt_packed.shape[0]
    Cin = wt_packed.shape[1] // kt
    Cout = wxy_packed.shape[0]
    pt, ph, pw = kt // 2, kh // 2, kw // 2
    wt5 = jnp.transpose(wt_packed.astype(jnp.float32).reshape(Cmid, kt, Cin),
                        (0, 2, 1))[:, :, :, None, None]                               # (Cmid,Cin,kt,1,1)
    wxy5 = jnp.transpose(wxy_packed.astype(jnp.float32).reshape(Cout, kh, kw, Cmid),
                         (0, 3, 1, 2))[:, :, None, :, :]                              # (Cout,Cmid,1,kh,kw)
    dn = ("NCDHW", "OIDHW", "NCDHW")
    xb = x.astype(jnp.bfloat16).astype(jnp.float32)
    mid = lax.conv_general_dilated(xb, wt5, (1, 1, 1), [(pt, pt), (0, 0), (0, 0)],
                                   dimension_numbers=dn, precision=lax.Precision.HIGHEST)
    mid = jnp.maximum(mid + bn_shift.reshape(1, Cmid, 1, 1, 1), 0.0)
    midb = mid.astype(jnp.bfloat16).astype(jnp.float32)
    return lax.conv_general_dilated(midb, wxy5, (1, 1, 1), [(0, 0), (ph, ph), (pw, pw)],
                                    dimension_numbers=dn, precision=lax.Precision.HIGHEST)


# ---------------------------------------------------------------------------
# Main
# ---------------------------------------------------------------------------

if __name__ == "__main__":
    key = jax.random.PRNGKey(0)
    k_x, k_p = jax.random.split(key)

    N, Cin, T, H, W = 2, 8, 8, 16, 16            # small NCTHW video clip
    Cmid, Cout = 32, 32                          # conv_t: Cin->Cmid, conv_xy: Cmid->Cout
    kt, kh, kw = 3, 3, 3

    x = jax.random.normal(k_x, (N, Cin, T, H, W), dtype=jnp.float32)
    params = init_conv2plus1d_params(k_p, Cin, Cmid, Cout, kt=kt, kh=kh, kw=kw)

    fwd = jax.jit(functools.partial(conv2plus1d_forward, kt=kt, kh=kh, kw=kw))
    out = jax.block_until_ready(fwd(x, params))
    assert out.shape == (N, Cout, T, H, W) and out.dtype == jnp.float32

    ref = jax.block_until_ready(conv2plus1d_reference(x, params, kt=kt, kh=kh, kw=kw))
    max_err = float(jnp.max(jnp.abs(out - ref)))
    assert max_err < 5e-2, f"kernel/reference mismatch: max |err| = {max_err}"

    print("KERNEL_OK")
</pallas_src>

<mosaic_0001>
module attributes {stable_mosaic.version = 11 : i64} {
  func.func @_conv2plus1d_kernel(%arg0: i32, %arg1: i32, %arg2: memref<1x8x2048xf32, #tpu.memory_space<vmem>>, %arg3: memref<32x24xbf16, #tpu.memory_space<vmem>>, %arg4: memref<32x1xf32, #tpu.memory_space<vmem>>, %arg5: memref<32x288xbf16, #tpu.memory_space<vmem>>, %arg6: memref<9x512xbf16, #tpu.memory_space<vmem>>, %arg7: memref<1x32x512xf32, #tpu.memory_space<vmem>>, %arg8: memref<8x1280xbf16, #tpu.memory_space<vmem>>, %arg9: memref<24x768xbf16, #tpu.memory_space<vmem>>, %arg10: memref<32x768xbf16, #tpu.memory_space<vmem>>, %arg11: memref<288x512xbf16, #tpu.memory_space<vmem>>) attributes {dimension_semantics = [#tpu.dimension_semantics<parallel>, #tpu.dimension_semantics<parallel>], iteration_bounds = array<i64: 2, 4>, scalar_prefetch = 0 : i64, scratch_operands = 4 : i64, tpu.core_type = #tpu.core_type<tc>, window_params = [{transform_indices = @transform_0, window_bounds = array<i64: 1, 8, 2048>}, {pipeline_mode = #tpu.pipeline_mode<synchronous>, transform_indices = @transform_1, window_bounds = array<i64: 32, 24>}, {pipeline_mode = #tpu.pipeline_mode<synchronous>, transform_indices = @transform_2, window_bounds = array<i64: 32, 1>}, {pipeline_mode = #tpu.pipeline_mode<synchronous>, transform_indices = @transform_3, window_bounds = array<i64: 32, 288>}, {transform_indices = @transform_4, window_bounds = array<i64: 9, 512>}, {transform_indices = @transform_5, window_bounds = array<i64: 1, 32, 512>}]} {
    %c512_i32 = arith.constant 512 : i32
    %0 = arith.muli %arg1, %c512_i32 : i32
    %1 = tpu.assume_multiple %0, 128 : i32
    %c0_i32 = arith.constant 0 : i32
    %2 = arith.cmpi eq, %arg1, %c0_i32 : i32
    %3 = arith.extui %2 : i1 to i32
    %c0_i32_0 = arith.constant 0 : i32
    %4 = arith.cmpi ne, %3, %c0_i32_0 : i32
    scf.if %4 {
      %cst_64 = arith.constant 0.000000e+00 : bf16
      %83 = vector.broadcast %cst_64 : bf16 to vector<8x384xbf16>
      %c0_65 = arith.constant 0 : index
      %c0_66 = arith.constant 0 : index
      %84 = vector.load %arg8[%c0_65, %c0_66] : memref<8x1280xbf16, #tpu.memory_space<vmem>>, vector<8x384xbf16>
      tpu.vector_store %arg8[%c0_65, %c0_66], %83 {strides = array<i32>} : memref<8x1280xbf16, #tpu.memory_space<vmem>>, vector<8x384xbf16>,
    } else {
    }
    %c0_i32_1 = arith.constant 0 : i32
    %5 = arith.cmpi sgt, %arg1, %c0_i32_1 : i32
    %6 = arith.extui %5 : i1 to i32
    %c0_i32_2 = arith.constant 0 : i32
    %7 = arith.cmpi ne, %6, %c0_i32_2 : i32
    scf.if %7 {
      %c512_i32_64 = arith.constant 512 : i32
      %83 = arith.muli %arg1, %c512_i32_64 : i32
      %c384_i32 = arith.constant 384 : i32
      %84 = arith.subi %83, %c384_i32 : i32
      %85 = tpu.assume_multiple %84, 128 : i32
      %c0_65 = arith.constant 0 : index
      %c0_66 = arith.constant 0 : index
      %86 = arith.index_cast %85 : i32 to index
      %87 = vector.load %arg2[%c0_65, %c0_66, %86] : memref<1x8x2048xf32, #tpu.memory_space<vmem>>, vector<1x8x384xf32>
      %88 = vector.shape_cast %87 : vector<1x8x384xf32> to vector<8x384xf32>
      %89 = arith.truncf %88 : vector<8x384xf32> to vector<8x384xbf16>
      %c0_67 = arith.constant 0 : index
      %c0_68 = arith.constant 0 : index
      %90 = vector.load %arg8[%c0_67, %c0_68] : memref<8x1280xbf16, #tpu.memory_space<vmem>>, vector<8x384xbf16>
      tpu.vector_store %arg8[%c0_67, %c0_68], %89 {strides = array<i32>} : memref<8x1280xbf16, #tpu.memory_space<vmem>>, vector<8x384xbf16>,
    } else {
    }
    %c0 = arith.constant 0 : index
    %c0_3 = arith.constant 0 : index
    %8 = arith.index_cast %1 : i32 to index
    %9 = vector.load %arg2[%c0, %c0_3, %8] : memref<1x8x2048xf32, #tpu.memory_space<vmem>>, vector<1x8x512xf32>
    %10 = vector.shape_cast %9 : vector<1x8x512xf32> to vector<8x512xf32>
    %11 = arith.truncf %10 : vector<8x512xf32> to vector<8x512xbf16>
    %c0_4 = arith.constant 0 : index
    %c384 = arith.constant 384 : index
    %12 = vector.load %arg8[%c0_4, %c384] : memref<8x1280xbf16, #tpu.memory_space<vmem>>, vector<8x512xbf16>
    tpu.vector_store %arg8[%c0_4, %c384], %11 {strides = array<i32>} : memref<8x1280xbf16, #tpu.memory_space<vmem>>, vector<8x512xbf16>,
    %c3_i32 = arith.constant 3 : i32
    %13 = arith.cmpi eq, %arg1, %c3_i32 : i32
    %14 = arith.extui %13 : i1 to i32
    %c0_i32_5 = arith.constant 0 : i32
    %15 = arith.cmpi ne, %14, %c0_i32_5 : i32
    scf.if %15 {
      %cst_64 = arith.constant 0.000000e+00 : bf16
      %83 = vector.broadcast %cst_64 : bf16 to vector<8x384xbf16>
      %c0_65 = arith.constant 0 : index
      %c896 = arith.constant 896 : index
      %84 = vector.load %arg8[%c0_65, %c896] : memref<8x1280xbf16, #tpu.memory_space<vmem>>, vector<8x384xbf16>
      tpu.vector_store %arg8[%c0_65, %c896], %83 {strides = array<i32>} : memref<8x1280xbf16, #tpu.memory_space<vmem>>, vector<8x384xbf16>,
    } else {
    }
    %c3_i32_6 = arith.constant 3 : i32
    %16 = arith.cmpi slt, %arg1, %c3_i32_6 : i32
    %17 = arith.extui %16 : i1 to i32
    %c0_i32_7 = arith.constant 0 : i32
    %18 = arith.cmpi ne, %17, %c0_i32_7 : i32
    scf.if %18 {
      %c1_i32 = arith.constant 1 : i32
      %83 = arith.addi %arg1, %c1_i32 : i32
      %c512_i32_64 = arith.constant 512 : i32
      %84 = arith.muli %83, %c512_i32_64 : i32
      %85 = tpu.assume_multiple %84, 128 : i32
      %c0_65 = arith.constant 0 : index
      %c0_66 = arith.constant 0 : index
      %86 = arith.index_cast %85 : i32 to index
      %87 = vector.load %arg2[%c0_65, %c0_66, %86] : memref<1x8x2048xf32, #tpu.memory_space<vmem>>, vector<1x8x384xf32>
      %88 = vector.shape_cast %87 : vector<1x8x384xf32> to vector<8x384xf32>
      %89 = arith.truncf %88 : vector<8x384xf32> to vector<8x384xbf16>
      %c0_67 = arith.constant 0 : index
      %c896 = arith.constant 896 : index
      %90 = vector.load %arg8[%c0_67, %c896] : memref<8x1280xbf16, #tpu.memory_space<vmem>>, vector<8x384xbf16>
      tpu.vector_store %arg8[%c0_67, %c896], %89 {strides = array<i32>} : memref<8x1280xbf16, #tpu.memory_space<vmem>>, vector<8x384xbf16>,
    } else {
    }
    %c0_8 = arith.constant 0 : index
    %c0_9 = arith.constant 0 : index
    %19 = vector.load %arg8[%c0_8, %c0_9] : memref<8x1280xbf16, #tpu.memory_space<vmem>>, vector<8x768xbf16>
    %c0_10 = arith.constant 0 : index
    %c0_11 = arith.constant 0 : index
    %20 = vector.load %arg9[%c0_10, %c0_11] : memref<24x768xbf16, #tpu.memory_space<vmem>>, vector<8x768xbf16>
    tpu.vector_store %arg9[%c0_10, %c0_11], %19 {strides = array<i32>} : memref<24x768xbf16, #tpu.memory_space<vmem>>, vector<8x768xbf16>,
    %c0_12 = arith.constant 0 : index
    %c256 = arith.constant 256 : index
    %21 = vector.load %arg8[%c0_12, %c256] : memref<8x1280xbf16, #tpu.memory_space<vmem>>, vector<8x768xbf16>
    %c8 = arith.constant 8 : index
    %c0_13 = arith.constant 0 : index
    %22 = vector.load %arg9[%c8, %c0_13] : memref<24x768xbf16, #tpu.memory_space<vmem>>, vector<8x768xbf16>
    tpu.vector_store %arg9[%c8, %c0_13], %21 {strides = array<i32>} : memref<24x768xbf16, #tpu.memory_space<vmem>>, vector<8x768xbf16>,
    %c0_14 = arith.constant 0 : index
    %c512 = arith.constant 512 : index
    %23 = vector.load %arg8[%c0_14, %c512] : memref<8x1280xbf16, #tpu.memory_space<vmem>>, vector<8x768xbf16>
    %c16 = arith.constant 16 : index
    %c0_15 = arith.constant 0 : index
    %24 = vector.load %arg9[%c16, %c0_15] : memref<24x768xbf16, #tpu.memory_space<vmem>>, vector<8x768xbf16>
    tpu.vector_store %arg9[%c16, %c0_15], %23 {strides = array<i32>} : memref<24x768xbf16, #tpu.memory_space<vmem>>, vector<8x768xbf16>,
    %c0_16 = arith.constant 0 : index
    %c0_17 = arith.constant 0 : index
    %25 = vector.load %arg3[%c0_16, %c0_17] : memref<32x24xbf16, #tpu.memory_space<vmem>>, vector<32x24xbf16>
    %c0_18 = arith.constant 0 : index
    %c0_19 = arith.constant 0 : index
    %26 = vector.load %arg9[%c0_18, %c0_19] : memref<24x768xbf16, #tpu.memory_space<vmem>>, vector<24x768xbf16>
    %cst = arith.constant dense<0.000000e+00> : vector<32x768xf32>
    %27 = tpu.matmul %25, %26, %cst {dimension_numbers = #tpu.dot_dimension_numbers<[1], [0], [0], [1], [0, 0, 1, 1], [], []>} : vector<32x24xbf16>, vector<24x768xbf16>, vector<32x768xf32> -> vector<32x768xf32>
    %c0_20 = arith.constant 0 : index
    %c0_21 = arith.constant 0 : index
    %28 = vector.load %arg4[%c0_20, %c0_21] : memref<32x1xf32, #tpu.memory_space<vmem>>, vector<32x1xf32>
    %29 = vector.broadcast %28 : vector<32x1xf32> to vector<32x768xf32>
    %30 = arith.addf %27, %29 : vector<32x768xf32>
    %cst_22 = arith.constant 0.000000e+00 : f32
    %31 = vector.broadcast %cst_22 : f32 to vector<32x768xf32>
    %32 = arith.maximumf %30, %31 : vector<32x768xf32>
    %33 = arith.truncf %32 : vector<32x768xf32> to vector<32x768xbf16>
    %c0_23 = arith.constant 0 : index
    %c0_24 = arith.constant 0 : index
    %34 = vector.load %arg10[%c0_23, %c0_24] : memref<32x768xbf16, #tpu.memory_space<vmem>>, vector<32x768xbf16>
    tpu.vector_store %arg10[%c0_23, %c0_24], %33 {strides = array<i32>} : memref<32x768xbf16, #tpu.memory_space<vmem>>, vector<32x768xbf16>,
    %c0_25 = arith.constant 0 : index
    %c111 = arith.constant 111 : index
    %35 = vector.load %arg10[%c0_25, %c111] : memref<32x768xbf16, #tpu.memory_space<vmem>>, vector<32x512xbf16>
    %c0_26 = arith.constant 0 : index
    %c0_27 = arith.constant 0 : index
    %36 = vector.load %arg6[%c0_26, %c0_27] : memref<9x512xbf16, #tpu.memory_space<vmem>>, vector<1x512xbf16>
    %37 = vector.broadcast %36 : vector<1x512xbf16> to vector<32x512xbf16>
    %38 = arith.mulf %35, %37 : vector<32x512xbf16>
    %c0_28 = arith.constant 0 : index
    %c0_29 = arith.constant 0 : index
    %39 = vector.load %arg11[%c0_28, %c0_29] : memref<288x512xbf16, #tpu.memory_space<vmem>>, vector<32x512xbf16>
    tpu.vector_store %arg11[%c0_28, %c0_29], %38 {strides = array<i32>} : memref<288x512xbf16, #tpu.memory_space<vmem>>, vector<32x512xbf16>,
    %c0_30 = arith.constant 0 : index
    %c112 = arith.constant 112 : index
    %40 = vector.load %arg10[%c0_30, %c112] : memref<32x768xbf16, #tpu.memory_space<vmem>>, vector<32x512xbf16>
    %c1 = arith.constant 1 : index
    %c0_31 = arith.constant 0 : index
    %41 = vector.load %arg6[%c1, %c0_31] : memref<9x512xbf16, #tpu.memory_space<vmem>>, vector<1x512xbf16>
    %42 = vector.broadcast %41 : vector<1x512xbf16> to vector<32x512xbf16>
    %43 = arith.mulf %40, %42 : vector<32x512xbf16>
    %c32 = arith.constant 32 : index
    %c0_32 = arith.constant 0 : index
    %44 = vector.load %arg11[%c32, %c0_32] : memref<288x512xbf16, #tpu.memory_space<vmem>>, vector<32x512xbf16>
    tpu.vector_store %arg11[%c32, %c0_32], %43 {strides = array<i32>} : memref<288x512xbf16, #tpu.memory_space<vmem>>, vector<32x512xbf16>,
    %c0_33 = arith.constant 0 : index
    %c113 = arith.constant 113 : index
    %45 = vector.load %arg10[%c0_33, %c113] : memref<32x768xbf16, #tpu.memory_space<vmem>>, vector<32x512xbf16>
    %c2 = arith.constant 2 : index
    %c0_34 = arith.constant 0 : index
    %46 = vector.load %arg6[%c2, %c0_34] : memref<9x512xbf16, #tpu.memory_space<vmem>>, vector<1x512xbf16>
    %47 = vector.broadcast %46 : vector<1x512xbf16> to vector<32x512xbf16>
    %48 = arith.mulf %45, %47 : vector<32x512xbf16>
    %c64 = arith.constant 64 : index
    %c0_35 = arith.constant 0 : index
    %49 = vector.load %arg11[%c64, %c0_35] : memref<288x512xbf16, #tpu.memory_space<vmem>>, vector<32x512xbf16>
    tpu.vector_store %arg11[%c64, %c0_35], %48 {strides = array<i32>} : memref<288x512xbf16, #tpu.memory_space<vmem>>, vector<32x512xbf16>,
    %c0_36 = arith.constant 0 : index
    %c127 = arith.constant 127 : index
    %50 = vector.load %arg10[%c0_36, %c127] : memref<32x768xbf16, #tpu.memory_space<vmem>>, vector<32x512xbf16>
    %c3 = arith.constant 3 : index
    %c0_37 = arith.constant 0 : index
    %51 = vector.load %arg6[%c3, %c0_37] : memref<9x512xbf16, #tpu.memory_space<vmem>>, vector<1x512xbf16>
    %52 = vector.broadcast %51 : vector<1x512xbf16> to vector<32x512xbf16>
    %53 = arith.mulf %50, %52 : vector<32x512xbf16>
    %c96 = arith.constant 96 : index
    %c0_38 = arith.constant 0 : index
    %54 = vector.load %arg11[%c96, %c0_38] : memref<288x512xbf16, #tpu.memory_space<vmem>>, vector<32x512xbf16>
    tpu.vector_store %arg11[%c96, %c0_38], %53 {strides = array<i32>} : memref<288x512xbf16, #tpu.memory_space<vmem>>, vector<32x512xbf16>,
    %c0_39 = arith.constant 0 : index
    %c128 = arith.constant 128 : index
    %55 = vector.load %arg10[%c0_39, %c128] : memref<32x768xbf16, #tpu.memory_space<vmem>>, vector<32x512xbf16>
    %c128_40 = arith.constant 128 : index
    %c0_41 = arith.constant 0 : index
    %56 = vector.load %arg11[%c128_40, %c0_41] : memref<288x512xbf16, #tpu.memory_space<vmem>>, vector<32x512xbf16>
    tpu.vector_store %arg11[%c128_40, %c0_41], %55 {strides = array<i32>} : memref<288x512xbf16, #tpu.memory_space<vmem>>, vector<32x512xbf16>,
    %c0_42 = arith.constant 0 : index
    %c129 = arith.constant 129 : index
    %57 = vector.load %arg10[%c0_42, %c129] : memref<32x768xbf16, #tpu.memory_space<vmem>>, vector<32x512xbf16>
    %c5 = arith.constant 5 : index
    %c0_43 = arith.constant 0 : index
    %58 = vector.load %arg6[%c5, %c0_43] : memref<9x512xbf16, #tpu.memory_space<vmem>>, vector<1x512xbf16>
    %59 = vector.broadcast %58 : vector<1x512xbf16> to vector<32x512xbf16>
    %60 = arith.mulf %57, %59 : vector<32x512xbf16>
    %c160 = arith.constant 160 : index
    %c0_44 = arith.constant 0 : index
    %61 = vector.load %arg11[%c160, %c0_44] : memref<288x512xbf16, #tpu.memory_space<vmem>>, vector<32x512xbf16>
    tpu.vector_store %arg11[%c160, %c0_44], %60 {strides = array<i32>} : memref<288x512xbf16, #tpu.memory_space<vmem>>, vector<32x512xbf16>,
    %c0_45 = arith.constant 0 : index
    %c143 = arith.constant 143 : index
    %62 = vector.load %arg10[%c0_45, %c143] : memref<32x768xbf16, #tpu.memory_space<vmem>>, vector<32x512xbf16>
    %c6 = arith.constant 6 : index
    %c0_46 = arith.constant 0 : index
    %63 = vector.load %arg6[%c6, %c0_46] : memref<9x512xbf16, #tpu.memory_space<vmem>>, vector<1x512xbf16>
    %64 = vector.broadcast %63 : vector<1x512xbf16> to vector<32x512xbf16>
    %65 = arith.mulf %62, %64 : vector<32x512xbf16>
    %c192 = arith.constant 192 : index
    %c0_47 = arith.constant 0 : index
    %66 = vector.load %arg11[%c192, %c0_47] : memref<288x512xbf16, #tpu.memory_space<vmem>>, vector<32x512xbf16>
    tpu.vector_store %arg11[%c192, %c0_47], %65 {strides = array<i32>} : memref<288x512xbf16, #tpu.memory_space<vmem>>, vector<32x512xbf16>,
    %c0_48 = arith.constant 0 : index
    %c144 = arith.constant 144 : index
    %67 = vector.load %arg10[%c0_48, %c144] : memref<32x768xbf16, #tpu.memory_space<vmem>>, vector<32x512xbf16>
    %c7 = arith.constant 7 : index
    %c0_49 = arith.constant 0 : index
    %68 = vector.load %arg6[%c7, %c0_49] : memref<9x512xbf16, #tpu.memory_space<vmem>>, vector<1x512xbf16>
    %69 = vector.broadcast %68 : vector<1x512xbf16> to vector<32x512xbf16>
    %70 = arith.mulf %67, %69 : vector<32x512xbf16>
    %c224 = arith.constant 224 : index
    %c0_50 = arith.constant 0 : index
    %71 = vector.load %arg11[%c224, %c0_50] : memref<288x512xbf16, #tpu.memory_space<vmem>>, vector<32x512xbf16>
    tpu.vector_store %arg11[%c224, %c0_50], %70 {strides = array<i32>} : memref<288x512xbf16, #tpu.memory_space<vmem>>, vector<32x512xbf16>,
    %c0_51 = arith.constant 0 : index
    %c145 = arith.constant 145 : index
    %72 = vector.load %arg10[%c0_51, %c145] : memref<32x768xbf16, #tpu.memory_space<vmem>>, vector<32x512xbf16>
    %c8_52 = arith.constant 8 : index
    %c0_53 = arith.constant 0 : index
    %73 = vector.load %arg6[%c8_52, %c0_53] : memref<9x512xbf16, #tpu.memory_space<vmem>>, vector<1x512xbf16>
    %74 = vector.broadcast %73 : vector<1x512xbf16> to vector<32x512xbf16>
    %75 = arith.mulf %72, %74 : vector<32x512xbf16>
    %c256_54 = arith.constant 256 : index
    %c0_55 = arith.constant 0 : index
    %76 = vector.load %arg11[%c256_54, %c0_55] : memref<288x512xbf16, #tpu.memory_space<vmem>>, vector<32x512xbf16>
    tpu.vector_store %arg11[%c256_54, %c0_55], %75 {strides = array<i32>} : memref<288x512xbf16, #tpu.memory_space<vmem>>, vector<32x512xbf16>,
    %c0_56 = arith.constant 0 : index
    %c0_57 = arith.constant 0 : index
    %77 = vector.load %arg5[%c0_56, %c0_57] : memref<32x288xbf16, #tpu.memory_space<vmem>>, vector<32x288xbf16>
    %c0_58 = arith.constant 0 : index
    %c0_59 = arith.constant 0 : index
    %78 = vector.load %arg11[%c0_58, %c0_59] : memref<288x512xbf16, #tpu.memory_space<vmem>>, vector<288x512xbf16>
    %cst_60 = arith.constant dense<0.000000e+00> : vector<32x512xf32>
    %79 = tpu.matmul %77, %78, %cst_60 {dimension_numbers = #tpu.dot_dimension_numbers<[1], [0], [0], [1], [0, 0, 1, 1], [], []>} : vector<32x288xbf16>, vector<288x512xbf16>, vector<32x512xf32> -> vector<32x512xf32>
    %c0_61 = arith.constant 0 : index
    %c0_62 = arith.constant 0 : index
    %c0_63 = arith.constant 0 : index
    %80 = vector.load %arg7[%c0_61, %c0_62, %c0_63] : memref<1x32x512xf32, #tpu.memory_space<vmem>>, vector<1x32x512xf32>
    %81 = vector.shape_cast %80 : vector<1x32x512xf32> to vector<32x512xf32>
    %82 = vector.shape_cast %79 : vector<32x512xf32> to vector<1x32x512xf32>
    tpu.vector_store %arg7[%c0_61, %c0_62, %c0_63], %82 {strides = array<i32>} : memref<1x32x512xf32, #tpu.memory_space<vmem>>, vector<1x32x512xf32>,
    return
  }
  func.func @transform_0(%arg0: i32, %arg1: i32) -> (i32, i32, i32) {
    %c0_i32 = arith.constant 0 : i32
    %c0_i32_0 = arith.constant 0 : i32
    %c0_i32_1 = arith.constant 0 : i32
    return %arg0, %c0_i32, %c0_i32_0 : i32, i32, i32
  }
  func.func @transform_1(%arg0: i32, %arg1: i32) -> (i32, i32) {
    %c0_i32 = arith.constant 0 : i32
    %c0_i32_0 = arith.constant 0 : i32
    %c0_i32_1 = arith.constant 0 : i32
    return %c0_i32, %c0_i32_0 : i32, i32
  }
  func.func @transform_2(%arg0: i32, %arg1: i32) -> (i32, i32) {
    %c0_i32 = arith.constant 0 : i32
    %c0_i32_0 = arith.constant 0 : i32
    %c0_i32_1 = arith.constant 0 : i32
    return %c0_i32, %c0_i32_0 : i32, i32
  }
  func.func @transform_3(%arg0: i32, %arg1: i32) -> (i32, i32) {
    %c0_i32 = arith.constant 0 : i32
    %c0_i32_0 = arith.constant 0 : i32
    %c0_i32_1 = arith.constant 0 : i32
    return %c0_i32, %c0_i32_0 : i32, i32
  }
  func.func @transform_4(%arg0: i32, %arg1: i32) -> (i32, i32) {
    %c0_i32 = arith.constant 0 : i32
    %c0_i32_0 = arith.constant 0 : i32
    return %c0_i32, %arg1 : i32, i32
  }
  func.func @transform_5(%arg0: i32, %arg1: i32) -> (i32, i32, i32) {
    %c0_i32 = arith.constant 0 : i32
    %c0_i32_0 = arith.constant 0 : i32
    return %arg0, %c0_i32, %arg1 : i32, i32, i32
  }
}

</mosaic_0001>

<llo_original>
// kernel: conv2plus1d_forward.1
$region0: #{conv2plus1d_forward.1}
  #allocation0 [shape = 'u32[]', space=smem, size = 0x4, offset = 0x4, fixed_abs, tag = 'smem constant byte address 0x4 - core index']
  #allocation1 [shape = 'u32[144,128]{1,0:T(1,128)}', space=vmem, size = 0x12000, scoped, tag = 'internal scratch']
  #allocation2 [shape = 'bf16[8,1280]{1,0:T(8,128)(2,1)}', space=vmem, size = 0x5000, scoped, tag = 'scratch operand']
  #allocation3 [shape = 'bf16[24,768]{1,0:T(8,128)(2,1)}', space=vmem, size = 0x9000, scoped, tag = 'scratch operand']
  #allocation4 [shape = 'bf16[32,768]{1,0:T(16,128)(2,1)}', space=vmem, size = 0xc000, scoped, tag = 'scratch operand']
  #allocation5 [shape = 'bf16[288,512]{1,0:T(16,128)(2,1)}', space=vmem, size = 0x48000, scoped, tag = 'scratch operand']
  %s0 = inlined_call_operand.vmem [shape: f32[2,8,2048], index: 0, kind: input, shape index: {}]
  %s1 = inlined_call_operand.vmem [shape: bf16[32,24], index: 1, kind: input, shape index: {}]
  %s2 = inlined_call_operand.vmem [shape: f32[32,1], index: 2, kind: input, shape index: {}]
  %s3 = inlined_call_operand.hbm [shape: bf16[32,288], index: 3, kind: input, shape index: {}]
  %s4 = inlined_call_operand.hbm [shape: bf16[9,2048], index: 4, kind: input, shape index: {}]
  %s5 = inlined_call_operand.vmem [shape: f32[2,32,2048], index: 5, kind: output, shape index: {}]
  %s6 = sld [smem:[#allocation0]]
  $region96: #{conv2plus1d_forward.1} parent=0
    _
  %s8 = ssub.s32 1, %s6
  %s9 = scalar_select 0, %s8, %s6
  $region1: #{conv2plus1d_forward.1} parent=0
    #allocation6 [shape = 'u8[24576]{0}', space=vmem, size = 0x6000, scoped, tag = 'input window, operand 3, single buffered']
    #allocation7 [shape = 's32[2]{0}', space=sflag, size = 0x8, scoped, tag = 'scoped memory for conv2plus1d_forward.1']
    #allocation8 [shape = 'u8[32768]{0}', space=vmem, size = 0x8000, scoped, tag = 'input window, operand 4']
    #allocation9 [shape = 's32[2]{0}', space=sflag, size = 0x8, scoped, tag = 'scoped memory for conv2plus1d_forward.1']
    #allocation10 [shape = 'u8[131072]{0}', space=vmem, size = 0x20000, scoped, tag = 'output window, operand 0']
    %10 = vsyncpa [#allocation7], 0
    %11 = vsyncpa [#allocation9], 0
    %s12 = scalar_lea.sflag [#allocation9], 1
    %13 = vsyncpa %s12, 0
    loop: start=0, step=1, limit=10
    $region2: #{conv2plus1d_forward.1} parent=1 // loop_pre_header
      _
    $region3: #{conv2plus1d_forward.1} parent=1 // loop_header
      %s15 = sphi 0, %s19
      %p16 = scmp.ge.s32.totalorder %s15, 10
      %s22 = sphi 0, %s34
      %s23 = sphi 0, %s30
      %s24 = sphi 0, %s22
      %s25 = sphi 0, %s23
      %s26 = sphi 0, %s24
      %s27 = sphi 0, %s25
      %s37 = sphi 0, %s39
      %s40 = sphi 0, %s37
      %s41 = sphi 0, %s40
      %s57 = sphi 0, %s41
      %s61 = sphi 0, %s61
      %s63 = sphi 0, %s61
      %s64 = sphi 0, %s63
      %s78 = sphi 0, %s64
      %s82 = sphi 0, %s82
      %s84 = sphi 0, %s82
      %s85 = sphi 0, %s84
      %s99 = sphi 0, %s85
      %s103 = sphi 0, %s103
      %s105 = sphi 0, %s103
      %s106 = sphi 0, %s105
      %s120 = sphi 0, %s106
      %s126 = sphi 0, %s128
      %s129 = sphi 0, %s126
      %s130 = sphi 0, %s129
      %s146 = sphi 0, %s130
      %s154 = sphi 0, %s156
      %s157 = sphi 0, %s154
      %s158 = sphi 0, %s157
      %s174 = sphi 0, %s158
    $region4: #{conv2plus1d_forward.1} parent=1 // loop_header_branch
      %18 = sbr.rel (%p16) target = $region8
    $region5: #{conv2plus1d_forward.1} parent=1 // loop_body
      %s20 = ssub.s32 %s15, 1
      %s21 = ssub.s32 %s15, 2
      %s28 = sadd.s32 1, %s23
      %p29 = scmp.ge.s32.totalorder %s28, 4
      %s30 = scalar_select %p29, 0, %s28
      %s31 = sadd.s32 1, %s22
      %s32 = scalar_select %p29, %s31, %s22
      %p33 = scmp.ge.s32.totalorder %s32, 2
      %s34 = scalar_select %p33, 0, %s32
      %s35 = ssub.s32 %s22, %s34
      %p36 = scmp.eq.s32.totalorder %s35, 0
      %s38 = sadd.s32 %s37, 1
      %s39 = scalar_select %p36, %s37, %s38
      %p42 = pneg %p36
      %p43 = scmp.eq.s32.totalorder %s15, 7
      %p44 = por %p42, %p43
      %p45 = scmp.ne.s32.totalorder %s37, %s40
      %p46 = scmp.eq.s32.totalorder %s15, 0
      %p47 = por %p45, %p46
      %p48 = scmp.ne.s32.totalorder %s37, %s40
      %p49 = scmp.eq.s32.totalorder %s20, 7
      %p50 = por %p48, %p49
      %p51 = scmp.ne.s32.totalorder %s40, %s41
      %p52 = scmp.eq.s32.totalorder %s20, 0
      %p53 = por %p51, %p52
      %p54 = scmp.ne.s32.totalorder %s40, %s41
      %p55 = scmp.eq.s32.totalorder %s21, 7
      %p56 = por %p54, %p55
      %p58 = scmp.ne.s32.totalorder %s41, %s57
      %p59 = scmp.eq.s32.totalorder %s21, 0
      %p60 = por %p58, %p59
      %s62 = sadd.s32 %s61, 1
      %p65 = scmp.eq.s32.totalorder %s15, 7
      %p66 = scmp.ne.s32.totalorder %s61, %s63
      %p67 = scmp.eq.s32.totalorder %s15, 0
      %p68 = por %p66, %p67
      %p69 = scmp.ne.s32.totalorder %s61, %s63
      %p70 = scmp.eq.s32.totalorder %s20, 7
      %p71 = por %p69, %p70
      %p72 = scmp.ne.s32.totalorder %s63, %s64
      %p73 = scmp.eq.s32.totalorder %s20, 0
      %p74 = por %p72, %p73
      %p75 = scmp.ne.s32.totalorder %s63, %s64
      %p76 = scmp.eq.s32.totalorder %s21, 7
      %p77 = por %p75, %p76
      %p79 = scmp.ne.s32.totalorder %s64, %s78
      %p80 = scmp.eq.s32.totalorder %s21, 0
      %p81 = por %p79, %p80
      %s83 = sadd.s32 %s82, 1
      %p86 = scmp.eq.s32.totalorder %s15, 7
      %p87 = scmp.ne.s32.totalorder %s82, %s84
      %p88 = scmp.eq.s32.totalorder %s15, 0
      %p89 = por %p87, %p88
      %p90 = scmp.ne.s32.totalorder %s82, %s84
      %p91 = scmp.eq.s32.totalorder %s20, 7
      %p92 = por %p90, %p91
      %p93 = scmp.ne.s32.totalorder %s84, %s85
      %p94 = scmp.eq.s32.totalorder %s20, 0
      %p95 = por %p93, %p94
      %p96 = scmp.ne.s32.totalorder %s84, %s85
      %p97 = scmp.eq.s32.totalorder %s21, 7
      %p98 = por %p96, %p97
      %p100 = scmp.ne.s32.totalorder %s85, %s99
      %p101 = scmp.eq.s32.totalorder %s21, 0
      %p102 = por %p100, %p101
      %s104 = sadd.s32 %s103, 1
      %p107 = scmp.eq.s32.totalorder %s15, 7
      %p108 = scmp.ne.s32.totalorder %s103, %s105
      %p109 = scmp.eq.s32.totalorder %s15, 0
      %p110 = por %p108, %p109
      %p111 = scmp.ne.s32.totalorder %s103, %s105
      %p112 = scmp.eq.s32.totalorder %s20, 7
      %p113 = por %p111, %p112
      %p114 = scmp.ne.s32.totalorder %s105, %s106
      %p115 = scmp.eq.s32.totalorder %s20, 0
      %p116 = por %p114, %p115
      %p117 = scmp.ne.s32.totalorder %s105, %s106
      %p118 = scmp.eq.s32.totalorder %s21, 7
      %p119 = por %p117, %p118
      %p121 = scmp.ne.s32.totalorder %s106, %s120
      %p122 = scmp.eq.s32.totalorder %s21, 0
      %p123 = por %p121, %p122
      %s124 = ssub.s32 %s23, %s30
      %p125 = scmp.eq.s32.totalorder %s124, 0
      %s127 = sadd.s32 %s126, 1
      %s128 = scalar_select %p125, %s126, %s127
      %p131 = pneg %p125
      %p132 = scmp.eq.s32.totalorder %s15, 7
      %p133 = por %p131, %p132
      %p134 = scmp.ne.s32.totalorder %s126, %s129
      %p135 = scmp.eq.s32.totalorder %s15, 0
      %p136 = por %p134, %p135
      %p137 = scmp.ne.s32.totalorder %s126, %s129
      %p138 = scmp.eq.s32.totalorder %s20, 7
      %p139 = por %p137, %p138
      %p140 = scmp.ne.s32.totalorder %s129, %s130
      %p141 = scmp.eq.s32.totalorder %s20, 0
      %p142 = por %p140, %p141
      %p143 = scmp.ne.s32.totalorder %s129, %s130
      %p144 = scmp.eq.s32.totalorder %s21, 7
      %p145 = por %p143, %p144
      %p147 = scmp.ne.s32.totalorder %s130, %s146
      %p148 = scmp.eq.s32.totalorder %s21, 0
      %p149 = por %p147, %p148
      %s150 = ssub.s32 %s22, %s34
      %s151 = ssub.s32 %s23, %s30
      %s152 = sor.u32 %s150, %s151
      %p153 = scmp.eq.s32.totalorder %s152, 0
      %s155 = sadd.s32 %s154, 1
      %s156 = scalar_select %p153, %s154, %s155
      %p159 = pneg %p153
      %p160 = scmp.eq.s32.totalorder %s15, 7
      %p161 = por %p159, %p160
      %p162 = scmp.ne.s32.totalorder %s154, %s157
      %p163 = scmp.eq.s32.totalorder %s15, 0
      %p164 = por %p162, %p163
      %p165 = scmp.ne.s32.totalorder %s154, %s157
      %p166 = scmp.eq.s32.totalorder %s20, 7
      %p167 = por %p165, %p166
      %p168 = scmp.ne.s32.totalorder %s157, %s158
      %p169 = scmp.eq.s32.totalorder %s20, 0
      %p170 = por %p168, %p169
      %p171 = scmp.ne.s32.totalorder %s157, %s158
      %p172 = scmp.eq.s32.totalorder %s21, 7
      %p173 = por %p171, %p172
      %p175 = scmp.ne.s32.totalorder %s158, %s174
      %p176 = scmp.eq.s32.totalorder %s21, 0
      %p177 = por %p175, %p176
      %p178 = scmp.le.s32.totalorder 1, %s15
      %p179 = scmp.lt.s32.totalorder %s15, 9
      %p180 = pnand %p178, %p179
      %p181 = pneg %p180
      // Predicated region
      $region9: #{conv2plus1d_forward.1} parent=5 // pred_check
        _
      $region10: #{conv2plus1d_forward.1} parent=5 // pred_check_branch
        %183 = sbr.rel (%p180) target = $region12
      $region11: #{conv2plus1d_forward.1} parent=5 // pred_region
        %s184 = ssub.s32 %s15, 1
        // Predicated region
        $region13: #{conv2plus1d_forward.1} parent=11 // pred_check
          %p185 = pneg %p74
        $region14: #{conv2plus1d_forward.1} parent=11 // pred_check_branch
          %187 = sbr.rel (%p185) target = $region16
        $region15: #{conv2plus1d_forward.1} parent=11 // pred_region
          _
        $region16: #{conv2plus1d_forward.1} parent=11 // pred_fallthru
          _
        // Predicated region
        $region17: #{conv2plus1d_forward.1} parent=11 // pred_check
          %p188 = pneg %p95
        $region18: #{conv2plus1d_forward.1} parent=11 // pred_check_branch
          %190 = sbr.rel (%p188) target = $region20
        $region19: #{conv2plus1d_forward.1} parent=11 // pred_region
          _
        $region20: #{conv2plus1d_forward.1} parent=11 // pred_fallthru
          _
        // Predicated region
        $region21: #{conv2plus1d_forward.1} parent=11 // pred_check
          %p191 = pneg %p116
        $region22: #{conv2plus1d_forward.1} parent=11 // pred_check_branch
          %193 = sbr.rel (%p191) target = $region24
        $region23: #{conv2plus1d_forward.1} parent=11 // pred_region
          %s195 = ssub.s32 768, 768
          %196 = vsyncadd [#allocation7], %s195
          %s197 = sshll.u32 [#allocation6], 4
          %s198 = int_to_ptr.vmem [resolvable:$true] %s197
          %203 = dma.hbm_to_vmem [thread:$0]  %s3, 768, %s198, [#allocation7], 192, 192, 12
        $region24: #{conv2plus1d_forward.1} parent=11 // pred_fallthru
          _
      $region12: #{conv2plus1d_forward.1} parent=5 // pred_fallthru
        _
      %p204 = scmp.lt.s32.totalorder %s15, 8
      // Predicated region
      $region25: #{conv2plus1d_forward.1} parent=5 // pred_check
        %p205 = pneg %p204
      $region26: #{conv2plus1d_forward.1} parent=5 // pred_check_branch
        %207 = sbr.rel (%p205) target = $region28
      $region27: #{conv2plus1d_forward.1} parent=5 // pred_region
        // Predicated region
        $region29: #{conv2plus1d_forward.1} parent=27 // pred_check
          %p208 = pneg %p47
        $region30: #{conv2plus1d_forward.1} parent=27 // pred_check_branch
          %210 = sbr.rel (%p208) target = $region32
        $region31: #{conv2plus1d_forward.1} parent=27 // pred_region
          %p211 = scmp.lt.s32.totalorder %s22, 1
          %s212 = scalar_select %p211, %s22, 1
          %s213 = smul.addr %s212, 16
          %s214 = smul.addr %s213, 8
          %s215 = scalar_lea.vmem %s0, %s214
        $region32: #{conv2plus1d_forward.1} parent=27 // pred_fallthru
          _
        // Predicated region
        $region33: #{conv2plus1d_forward.1} parent=27 // pred_check
          %p216 = pneg %p136
        $region34: #{conv2plus1d_forward.1} parent=27 // pred_check_branch
          %218 = sbr.rel (%p216) target = $region36
        $region35: #{conv2plus1d_forward.1} parent=27 // pred_region
          %s219 = sand.u32 %s126, 1
          %s220 = scalar_lea.sflag [#allocation9], %s219
          %s221 = sand.u32 %s126, 1
          %s222 = smul.addr %s221, 32
          %s223 = scalar_lea.vmem [#allocation8], %s222
          %s224 = smul.u32 4, %s23
          %s226 = ssub.s32 512, 512
          %227 = vsyncadd %s220, %s226
          %s228 = smul.addr %s224, 64
          %s229 = scalar_lea.hbm %s4, %s228
          %s230 = sshll.u32 %s223, 4
          %s231 = int_to_ptr.vmem [resolvable:$true] %s230
          %236 = dma.hbm_to_vmem [thread:$0]  %s229, 512, %s231, %s220, 1024, 256, 16
        $region36: #{conv2plus1d_forward.1} parent=27 // pred_fallthru
          _
      $region28: #{conv2plus1d_forward.1} parent=5 // pred_fallthru
        _
      %p237 = scmp.le.s32.totalorder 1, %s15
      %p238 = scmp.lt.s32.totalorder %s15, 9
      %p239 = pnand %p237, %p238
      %p240 = pneg %p239
      // Predicated region
      $region37: #{conv2plus1d_forward.1} parent=5 // pred_check
        _
      $region38: #{conv2plus1d_forward.1} parent=5 // pred_check_branch
        %242 = sbr.rel (%p239) target = $region40
      $region39: #{conv2plus1d_forward.1} parent=5 // pred_region
        %s243 = ssub.s32 %s15, 1
        // Predicated region
        $region41: #{conv2plus1d_forward.1} parent=39 // pred_check
          %p244 = pneg %p116
        $region42: #{conv2plus1d_forward.1} parent=39 // pred_check_branch
          %246 = sbr.rel (%p244) target = $region44
        $region43: #{conv2plus1d_forward.1} parent=39 // pred_region
          %247 = dma.done [#allocation7], 768
        $region44: #{conv2plus1d_forward.1} parent=39 // pred_fallthru
          _
        %s248 = sand.u32 %s129, 1
        %s249 = scalar_lea.sflag [#allocation9], %s248
        %s250 = sand.u32 %s129, 1
        %s251 = smul.addr %s250, 32
        %s252 = scalar_lea.vmem [#allocation8], %s251
        // Predicated region
        $region45: #{conv2plus1d_forward.1} parent=39 // pred_check
          %p253 = pneg %p142
        $region46: #{conv2plus1d_forward.1} parent=39 // pred_check_branch
          %255 = sbr.rel (%p253) target = $region48
        $region47: #{conv2plus1d_forward.1} parent=39 // pred_region
          %256 = dma.done %s249, 512
        $region48: #{conv2plus1d_forward.1} parent=39 // pred_fallthru
          _
        %p257 = scmp.lt.s32.totalorder %s24, 1
        %s258 = scalar_select %p257, %s24, 1
        %s259 = smul.addr %s258, 16
        %s260 = smul.addr %s259, 8
        %s261 = scalar_lea.vmem %s0, %s260
        %p262 = pneg %p53
        %p263 = pneg %p50
        %p264 = pneg %p74
        %p265 = pneg %p71
        %p266 = pneg %p95
        %p267 = pneg %p92
        %p268 = pneg %p116
        %p269 = pneg %p113
        %s270 = sand.u32 %s129, 1
        %s271 = scalar_lea.sflag [#allocation9], %s270
        %s272 = sand.u32 %s129, 1
        %s273 = smul.addr %s272, 32
        %s274 = scalar_lea.vmem [#allocation8], %s273
        %p275 = pneg %p142
        %p276 = pneg %p139
        %p277 = pneg %p170
        %p278 = pneg %p167
        %s279 = sand.u32 %s157, 1
        %s280 = sand.u32 %s157, 1
        %s281 = smul.addr %s280, 128
        %s282 = scalar_lea.vmem [#allocation10], %s281
        %p283 = scmp.lt.s32.totalorder %s24, 1
        %s284 = scalar_select %p283, %s24, 1
        %s285 = smul.addr %s284, 16
        %s286 = smul.addr %s285, 8
        %s287 = scalar_lea.vmem %s0, %s286
        %s288 = smul.u32 4, %s25
        %s289 = smul.u32 4, %s25
        %s291 = smul.u32 %s25, 512
        %p292 = scmp.eq.s32.totalorder %s25, 0
        // Predicated region
        $region49: #{conv2plus1d_forward.1} parent=39 // pred_check
          %p293 = pneg %p292
        $region50: #{conv2plus1d_forward.1} parent=39 // pred_check_branch
          %295 = sbr.rel (%p293) target = $region52
        $region51: #{conv2plus1d_forward.1} parent=39 // pred_region
          %296 = vst [vmem:[#allocation2] sm:$0xff] 0
          %297 = vst [vmem:[#allocation2 + $0x8] sm:$0xf] 0
        $region52: #{conv2plus1d_forward.1} parent=39 // pred_fallthru
          _
        %p298 = scmp.gt.s32.totalorder %s25, 0
        // Predicated region
        $region53: #{conv2plus1d_forward.1} parent=39 // pred_check
          %p299 = pneg %p298
        $region54: #{conv2plus1d_forward.1} parent=39 // pred_check_branch
          %301 = sbr.rel (%p299) target = $region56
        $region55: #{conv2plus1d_forward.1} parent=39 // pred_region
          %s302 = ssub.s32 %s291, 384
          %s303 = sshra.s32 %s302, 7
          %s304 = sand.u32 %s302, 127
          %s305 = smul.addr %s303, 8
          %s306 = scalar_lea.vmem %s287, %s305
          %v307 = vld [vmem:[%s306] sm:$0xff]
          %v308 = vld [vmem:[%s306 + $0x8] sm:$0xff]
          %v309 = vld [vmem:[%s306 + $0x10] sm:$0xff]
          %v310 = vpack.c.bf16 %v307, %v307
          %v311 = vpack.c.bf16 %v308, %v308
          %v312 = vpack.c.bf16 %v309, %v309
          %v316 = vunpack.c.l.b16 %v310
          %v317 = vunpack.c.l.b16 %v311
          %v318 = vunpack.c.l.b16 %v312
          %v319 = vpack.c.b16 %v317, %v316
          %v320 = vpack.c.b16 %v318, %v318
          %323 = vst [vmem:[#allocation2] sm:$0xff] %v319
          %324 = vst [vmem:[#allocation2 + $0x8] sm:$0xf] %v320
        $region56: #{conv2plus1d_forward.1} parent=39 // pred_fallthru
          _
        %s325 = sshra.s32 %s291, 7
        %s326 = sand.u32 %s291, 127
        %s327 = smul.addr %s325, 8
        %s328 = scalar_lea.vmem %s287, %s327
        %v329 = vld [vmem:[%s328] sm:$0xff]
        %v330 = vld [vmem:[%s328 + $0x8] sm:$0xff]
        %v331 = vld [vmem:[%s328 + $0x10] sm:$0xff]
        %v332 = vld [vmem:[%s328 + $0x18] sm:$0xff]
        %v333 = vpack.c.bf16 %v329, %v329
        %v334 = vpack.c.bf16 %v330, %v330
        %v335 = vpack.c.bf16 %v331, %v331
        %v336 = vpack.c.bf16 %v332, %v332
        %v341 = vunpack.c.l.b16 %v333
        %v342 = vunpack.c.l.b16 %v334
        %v343 = vunpack.c.l.b16 %v335
        %v344 = vunpack.c.l.b16 %v336
        %v345 = vpack.c.b16 %v342, %v341
        %v346 = vpack.c.b16 %v344, %v343
        %349 = vst [vmem:[#allocation2 + $0xc] sm:$0xff] %v345
        %350 = vst [vmem:[#allocation2 + $0x14] sm:$0xff] %v346
        %p351 = scmp.eq.s32.totalorder %s25, 3
        // Predicated region
        $region57: #{conv2plus1d_forward.1} parent=39 // pred_check
          %p352 = pneg %p351
        $region58: #{conv2plus1d_forward.1} parent=39 // pred_check_branch
          %354 = sbr.rel (%p352) target = $region60
        $region59: #{conv2plus1d_forward.1} parent=39 // pred_region
          %355 = vst [vmem:[#allocation2 + $0x1c] sm:$0xff] 0
          %356 = vst [vmem:[#allocation2 + $0x24] sm:$0xf] 0
        $region60: #{conv2plus1d_forward.1} parent=39 // pred_fallthru
          _
        %p357 = scmp.lt.s32.totalorder %s25, 3
        // Predicated region
        $region61: #{conv2plus1d_forward.1} parent=39 // pred_check
          %p358 = pneg %p357
        $region62: #{conv2plus1d_forward.1} parent=39 // pred_check_branch
          %360 = sbr.rel (%p358) target = $region64
        $region63: #{conv2plus1d_forward.1} parent=39 // pred_region
          %s361 = sadd.s32 %s25, 1
          %s362 = smul.u32 %s361, 512
          %s363 = sshra.s32 %s362, 7
          %s364 = sand.u32 %s362, 127
          %s365 = smul.addr %s363, 8
          %s366 = scalar_lea.vmem %s287, %s365
          %v367 = vld [vmem:[%s366] sm:$0xff]
          %v368 = vld [vmem:[%s366 + $0x8] sm:$0xff]
          %v369 = vld [vmem:[%s366 + $0x10] sm:$0xff]
          %v370 = vpack.c.bf16 %v367, %v367
          %v371 = vpack.c.bf16 %v368, %v368
          %v372 = vpack.c.bf16 %v369, %v369
          %v376 = vunpack.c.l.b16 %v370
          %v377 = vunpack.c.l.b16 %v371
          %v378 = vunpack.c.l.b16 %v372
          %v379 = vpack.c.b16 %v377, %v376
          %v380 = vpack.c.b16 %v378, %v378
          %383 = vst [vmem:[#allocation2 + $0x1c] sm:$0xff] %v379
          %384 = vst [vmem:[#allocation2 + $0x24] sm:$0xf] %v380
        $region64: #{conv2plus1d_forward.1} parent=39 // pred_fallthru
          _
        %v385 = vld [vmem:[#allocation2] sm:$0xff]
        %v386 = vld [vmem:[#allocation2 + $0x8] sm:$0xff]
        %v387 = vld [vmem:[#allocation2 + $0x10] sm:$0xff]
        %388 = vst [vmem:[#allocation3] sm:$0xff] %v385
        %389 = vst [vmem:[#allocation3 + $0x8] sm:$0xff] %v386
        %390 = vst [vmem:[#allocation3 + $0x10] sm:$0xff] %v387
        %v391 = vld [vmem:[#allocation2 + $0x8] sm:$0xff]
        %v392 = vld [vmem:[#allocation2 + $0x10] sm:$0xff]
        %v393 = vld [vmem:[#allocation2 + $0x18] sm:$0xff]
        %394 = vst [vmem:[#allocation3 + $0x18] sm:$0xff] %v391
        %395 = vst [vmem:[#allocation3 + $0x20] sm:$0xff] %v392
        %396 = vst [vmem:[#allocation3 + $0x28] sm:$0xff] %v393
        %v397 = vld [vmem:[#allocation2 + $0x10] sm:$0xff]
        %v398 = vld [vmem:[#allocation2 + $0x18] sm:$0xff]
        %v399 = vld [vmem:[#allocation2 + $0x20] sm:$0xff]
        %400 = vst [vmem:[#allocation3 + $0x30] sm:$0xff] %v397
        %401 = vst [vmem:[#allocation3 + $0x38] sm:$0xff] %v398
        %402 = vst [vmem:[#allocation3 + $0x40] sm:$0xff] %v399
        %v403 = vld [vmem:[%s1] sm:$0xf]
        %v404 = vld [vmem:[%s1 + $0x4] sm:$0xf]
        %v405 = vld [vmem:[%s1 + $0x8] sm:$0xf]
        %v406 = vld [vmem:[%s1 + $0xc] sm:$0xf]
        %v407 = vld [vmem:[#allocation3] sm:$0xff]
        %v408 = vld [vmem:[#allocation3 + $0x8] sm:$0xff]
        %v409 = vld [vmem:[#allocation3 + $0x10] sm:$0xff]
        %v410 = vld [vmem:[#allocation3 + $0x18] sm:$0xff]
        %v411 = vld [vmem:[#allocation3 + $0x20] sm:$0xff]
        %v412 = vld [vmem:[#allocation3 + $0x28] sm:$0xff]
        %v413 = vld [vmem:[#allocation3 + $0x30] sm:$0xff]
        %v414 = vld [vmem:[#allocation3 + $0x38] sm:$0xff]
        %v415 = vld [vmem:[#allocation3 + $0x40] sm:$0xff]
        %v416 = vld [vmem:[%s2] sm:$0xff]
        %v417 = vld [vmem:[%s2 + $0x8] sm:$0xff]
        %v418 = vld [vmem:[%s2 + $0x10] sm:$0xff]
        %v419 = vld [vmem:[%s2 + $0x18] sm:$0xff]
        %421 = vset.pattern.permute.xlu0 0
        %422 = vperm.xlu0 %421, %v416
        %v423 = vpop.permute.xlu0 %422
        %426 = vset.pattern.permute.xlu0 0
        %427 = vperm.xlu0 %426, %v417
        %v428 = vpop.permute.xlu0 %427
        %431 = vset.pattern.permute.xlu0 0
        %432 = vperm.xlu0 %431, %v418
        %v433 = vpop.permute.xlu0 %432
        %436 = vset.pattern.permute.xlu0 0
        %437 = vperm.xlu0 %436, %v419
        %v438 = vpop.permute.xlu0 %437
        %v444 = vunpack.c.l.b16 %v403
        %v445 = vunpack.c.l.b16 %v404
        %v446 = vunpack.c.l.b16 %v405
        %v447 = vunpack.c.l.b16 %v406
        %v448 = vpack.c.b16 %v445, %v444
        %v449 = vpack.c.b16 %v447, %v446
        %v459 = vunpack.c.l.b16 %v407
        %v460 = vunpack.c.h.b16 %v407
        %v461 = vunpack.c.l.b16 %v408
        %v462 = vunpack.c.h.b16 %v408
        %v463 = vunpack.c.l.b16 %v409
        %v464 = vunpack.c.h.b16 %v409
        %v465 = vunpack.c.l.b16 %v410
        %v466 = vunpack.c.h.b16 %v410
        %v467 = vunpack.c.l.b16 %v411
        %v468 = vunpack.c.h.b16 %v411
        %v469 = vunpack.c.l.b16 %v412
        %v470 = vunpack.c.h.b16 %v412
        %v471 = vunpack.c.l.b16 %v413
        %v472 = vunpack.c.h.b16 %v413
        %v473 = vunpack.c.l.b16 %v414
        %v474 = vunpack.c.h.b16 %v414
        %v475 = vunpack.c.l.b16 %v415
        %v476 = vunpack.c.h.b16 %v415
        %v477 = vpack.c.b16 %v465, %v459
        %v478 = vpack.c.b16 %v466, %v460
        %v479 = vpack.c.b16 %v467, %v461
        %v480 = vpack.c.b16 %v468, %v462
        %v481 = vpack.c.b16 %v469, %v463
        %v482 = vpack.c.b16 %v470, %v464
        %v483 = vpack.c.b16 %v471, %v471
        %v484 = vpack.c.b16 %v472, %v472
        %v485 = vpack.c.b16 %v473, %v473
        %v486 = vpack.c.b16 %v474, %v474
        %v487 = vpack.c.b16 %v475, %v475
        %v488 = vpack.c.b16 %v476, %v476
        %vm495 = vcmask 195584
        %v497 = vsel %vm495, %v448, 0
        %v500 = vsel %vm495, %v449, 0
        %vm502 = vcmask 1043456
        %v504 = vsel %vm502, %v483, 0
        %v507 = vsel %vm502, %v484, 0
        %v510 = vsel %vm502, %v485, 0
        %v513 = vsel %vm502, %v486, 0
        %v516 = vsel %vm502, %v487, 0
        %v519 = vsel %vm502, %v488, 0
        %521 = vmatprep.subr.bf16.mxu0 %v478
        %522 = vmatpush1.bf16.msra.mxu0 %v477
        %523 = vmatprep.subr.bf16.mxu0 %v507
        %524 = vmatpush1.bf16.msra.mxu0 %v504
        %525 = vmatprep.subr.bf16.mxu0 0
        %526 = vmatpush1.bf16.msra.mxu0 0
        %527 = vmatprep.subr.bf16.mxu0 0
        %528 = vmatpush1.bf16.msra.mxu0 0
        %529 = vmatprep.subr.bf16.mxu0 0
        %530 = vmatpush1.bf16.msra.mxu0 0
        %531 = vmatprep.subr.bf16.mxu0 0
        %532 = vmatpush1.bf16.msra.mxu0 0
        %533 = vmatprep.subr.bf16.mxu0 0
        %534 = vmatpush1.bf16.msra.mxu0 0
        %535 = vmatprep.subr.bf16.mxu0 0
        %536 = vmatpush1.bf16.msra.mxu0 0
        %537 = vmatprep.subr.bf16.mxu0 0
        %538 = vmatpush1.bf16.msra.mxu0 0
        %539 = vmatprep.subr.bf16.mxu0 0
        %540 = vmatpush1.bf16.msra.mxu0 0
        %541 = vmatprep.subr.bf16.mxu0 0
        %542 = vmatpush1.bf16.msra.mxu0 0
        %543 = vmatprep.subr.bf16.mxu0 0
        %544 = vmatpush1.bf16.msra.mxu0 0
        %545 = vmatprep.subr.bf16.mxu0 0
        %546 = vmatpush1.bf16.msra.mxu0 0
        %547 = vmatprep.subr.bf16.mxu0 0
        %548 = vmatpush1.bf16.msra.mxu0 0
        %549 = vmatprep.subr.bf16.mxu0 0
        %550 = vmatpush1.bf16.msra.mxu0 0
        %551 = vmatprep.subr.bf16.mxu0 0
        %552 = vmatpush1.bf16.msra.mxu0 0
        %553 = vmatprep.mubr.bf16.mxu0 0
        %554 = vmatmul.mubr.bf16.gmra.mrb[0].mxu0 %v497
        %v555 = vpop.f32.mrb[0].mxu0
        %v556 = vadd.f32 %v423, %v555
        %v557 = vpop.f32.mrb[0].mxu0
        %v558 = vadd.f32 %v423, %v557
        %v559 = vpop.f32.mrb[0].mxu0
        %v560 = vadd.f32 %v428, %v559
        %v561 = vpop.f32.mrb[0].mxu0
        %v562 = vadd.f32 %v428, %v561
        %563 = vmatprep.mubr.bf16.mxu0 0
        %564 = vmatmul.mubr.bf16.gmra.mrb[0].mxu0 %v500
        %v565 = vpop.f32.mrb[0].mxu0
        %v566 = vadd.f32 %v433, %v565
        %v567 = vpop.f32.mrb[0].mxu0
        %v568 = vadd.f32 %v433, %v567
        %v569 = vpop.f32.mrb[0].mxu0
        %v570 = vadd.f32 %v438, %v569
        %v571 = vpop.f32.mrb[0].mxu0
        %v572 = vadd.f32 %v438, %v571
        %573 = vdwg.mxu0
        %574 = vmatprep.subr.bf16.mxu0 %v480
        %575 = vmatpush1.bf16.msra.mxu0 %v479
        %576 = vmatprep.subr.bf16.mxu0 %v513
        %577 = vmatpush1.bf16.msra.mxu0 %v510
        %578 = vmatprep.subr.bf16.mxu0 0
        %579 = vmatpush1.bf16.msra.mxu0 0
        %580 = vmatprep.subr.bf16.mxu0 0
        %581 = vmatpush1.bf16.msra.mxu0 0
        %582 = vmatprep.subr.bf16.mxu0 0
        %583 = vmatpush1.bf16.msra.mxu0 0
        %584 = vmatprep.subr.bf16.mxu0 0
        %585 = vmatpush1.bf16.msra.mxu0 0
        %586 = vmatprep.subr.bf16.mxu0 0
        %587 = vmatpush1.bf16.msra.mxu0 0
        %588 = vmatprep.subr.bf16.mxu0 0
        %589 = vmatpush1.bf16.msra.mxu0 0
        %590 = vmatprep.subr.bf16.mxu0 0
        %591 = vmatpush1.bf16.msra.mxu0 0
        %592 = vmatprep.subr.bf16.mxu0 0
        %593 = vmatpush1.bf16.msra.mxu0 0
        %594 = vmatprep.subr.bf16.mxu0 0
        %595 = vmatpush1.bf16.msra.mxu0 0
        %596 = vmatprep.subr.bf16.mxu0 0
        %597 = vmatpush1.bf16.msra.mxu0 0
        %598 = vmatprep.subr.bf16.mxu0 0
        %599 = vmatpush1.bf16.msra.mxu0 0
        %600 = vmatprep.subr.bf16.mxu0 0
        %601 = vmatpush1.bf16.msra.mxu0 0
        %602 = vmatprep.subr.bf16.mxu0 0
        %603 = vmatpush1.bf16.msra.mxu0 0
        %604 = vmatprep.subr.bf16.mxu0 0
        %605 = vmatpush1.bf16.msra.mxu0 0
        %606 = vmatprep.mubr.bf16.mxu0 0
        %607 = vmatmul.mubr.bf16.gmra.mrb[0].mxu0 %v497
        %v608 = vpop.f32.mrb[0].mxu0
        %v609 = vadd.f32 %v423, %v608
        %v610 = vpop.f32.mrb[0].mxu0
        %v611 = vadd.f32 %v423, %v610
        %v612 = vpop.f32.mrb[0].mxu0
        %v613 = vadd.f32 %v428, %v612
        %v614 = vpop.f32.mrb[0].mxu0
        %v615 = vadd.f32 %v428, %v614
        %616 = vmatprep.mubr.bf16.mxu0 0
        %617 = vmatmul.mubr.bf16.gmra.mrb[0].mxu0 %v500
        %v618 = vpop.f32.mrb[0].mxu0
        %v619 = vadd.f32 %v433, %v618
        %v620 = vpop.f32.mrb[0].mxu0
        %v621 = vadd.f32 %v433, %v620
        %v622 = vpop.f32.mrb[0].mxu0
        %v623 = vadd.f32 %v438, %v622
        %v624 = vpop.f32.mrb[0].mxu0
        %v625 = vadd.f32 %v438, %v624
        %626 = vdwg.mxu0
        %627 = vmatprep.subr.bf16.mxu0 %v482
        %628 = vmatpush1.bf16.msra.mxu0 %v481
        %629 = vmatprep.subr.bf16.mxu0 %v519
        %630 = vmatpush1.bf16.msra.mxu0 %v516
        %631 = vmatprep.subr.bf16.mxu0 0
        %632 = vmatpush1.bf16.msra.mxu0 0
        %633 = vmatprep.subr.bf16.mxu0 0
        %634 = vmatpush1.bf16.msra.mxu0 0
        %635 = vmatprep.subr.bf16.mxu0 0
        %636 = vmatpush1.bf16.msra.mxu0 0
        %637 = vmatprep.subr.bf16.mxu0 0
        %638 = vmatpush1.bf16.msra.mxu0 0
        %639 = vmatprep.subr.bf16.mxu0 0
        %640 = vmatpush1.bf16.msra.mxu0 0
        %641 = vmatprep.subr.bf16.mxu0 0
        %642 = vmatpush1.bf16.msra.mxu0 0
        %643 = vmatprep.subr.bf16.mxu0 0
        %644 = vmatpush1.bf16.msra.mxu0 0
        %645 = vmatprep.subr.bf16.mxu0 0
        %646 = vmatpush1.bf16.msra.mxu0 0
        %647 = vmatprep.subr.bf16.mxu0 0
        %648 = vmatpush1.bf16.msra.mxu0 0
        %649 = vmatprep.subr.bf16.mxu0 0
        %650 = vmatpush1.bf16.msra.mxu0 0
        %651 = vmatprep.subr.bf16.mxu0 0
        %652 = vmatpush1.bf16.msra.mxu0 0
        %653 = vmatprep.subr.bf16.mxu0 0
        %654 = vmatpush1.bf16.msra.mxu0 0
        %655 = vmatprep.subr.bf16.mxu0 0
        %656 = vmatpush1.bf16.msra.mxu0 0
        %657 = vmatprep.subr.bf16.mxu0 0
        %658 = vmatpush1.bf16.msra.mxu0 0
        %659 = vmatprep.mubr.bf16.mxu0 0
        %660 = vmatmul.mubr.bf16.gmra.mrb[0].mxu0 %v497
        %v661 = vpop.f32.mrb[0].mxu0
        %v662 = vadd.f32 %v423, %v661
        %v663 = vpop.f32.mrb[0].mxu0
        %v664 = vadd.f32 %v423, %v663
        %v665 = vpop.f32.mrb[0].mxu0
        %v666 = vadd.f32 %v428, %v665
        %v667 = vpop.f32.mrb[0].mxu0
        %v668 = vadd.f32 %v428, %v667
        %669 = vmatprep.mubr.bf16.mxu0 0
        %670 = vmatmul.mubr.bf16.gmra.mrb[0].mxu0 %v500
        %v671 = vpop.f32.mrb[0].mxu0
        %v672 = vadd.f32 %v433, %v671
        %v673 = vpop.f32.mrb[0].mxu0
        %v674 = vadd.f32 %v433, %v673
        %v675 = vpop.f32.mrb[0].mxu0
        %v676 = vadd.f32 %v438, %v675
        %v677 = vpop.f32.mrb[0].mxu0
        %v678 = vadd.f32 %v438, %v677
        %679 = vdwg.mxu0
        %v680 = vmax.f32 %v556, 0.0
        %v681 = vmax.f32 %v558, 0.0
        %v682 = vmax.f32 %v609, 0.0
        %v683 = vmax.f32 %v611, 0.0
        %v684 = vmax.f32 %v662, 0.0
        %v685 = vmax.f32 %v664, 0.0
        %v686 = vmax.f32 %v560, 0.0
        %v687 = vmax.f32 %v562, 0.0
        %v688 = vmax.f32 %v613, 0.0
        %v689 = vmax.f32 %v615, 0.0
        %v690 = vmax.f32 %v666, 0.0
        %v691 = vmax.f32 %v668, 0.0
        %v692 = vmax.f32 %v566, 0.0
        %v693 = vmax.f32 %v568, 0.0
        %v694 = vmax.f32 %v619, 0.0
        %v695 = vmax.f32 %v621, 0.0
        %v696 = vmax.f32 %v672, 0.0
        %v697 = vmax.f32 %v674, 0.0
        %v698 = vmax.f32 %v570, 0.0
        %v699 = vmax.f32 %v572, 0.0
        %v700 = vmax.f32 %v623, 0.0
        %v701 = vmax.f32 %v625, 0.0
        %v702 = vmax.f32 %v676, 0.0
        %v703 = vmax.f32 %v678, 0.0
        %v704 = vpack.c.bf16 %v686, %v680
        %v705 = vpack.c.bf16 %v687, %v681
        %v706 = vpack.c.bf16 %v688, %v682
        %v707 = vpack.c.bf16 %v689, %v683
        %v708 = vpack.c.bf16 %v690, %v684
        %v709 = vpack.c.bf16 %v691, %v685
        %v710 = vpack.c.bf16 %v698, %v692
        %v711 = vpack.c.bf16 %v699, %v693
        %v712 = vpack.c.bf16 %v700, %v694
        %v713 = vpack.c.bf16 %v701, %v695
        %v714 = vpack.c.bf16 %v702, %v696
        %v715 = vpack.c.bf16 %v703, %v697
        %716 = vst [vmem:[#allocation4] sm:$0xff] %v704
        %717 = vst [vmem:[#allocation4 + $0x8] sm:$0xff] %v705
        %718 = vst [vmem:[#allocation4 + $0x10] sm:$0xff] %v706
        %719 = vst [vmem:[#allocation4 + $0x18] sm:$0xff] %v707
        %720 = vst [vmem:[#allocation4 + $0x20] sm:$0xff] %v708
        %721 = vst [vmem:[#allocation4 + $0x28] sm:$0xff] %v709
        %722 = vst [vmem:[#allocation4 + $0x30] sm:$0xff] %v710
        %723 = vst [vmem:[#allocation4 + $0x38] sm:$0xff] %v711
        %724 = vst [vmem:[#allocation4 + $0x40] sm:$0xff] %v712
        %725 = vst [vmem:[#allocation4 + $0x48] sm:$0xff] %v713
        %726 = vst [vmem:[#allocation4 + $0x50] sm:$0xff] %v714
        %727 = vst [vmem:[#allocation4 + $0x58] sm:$0xff] %v715
        %v728 = vld [vmem:[#allocation4] sm:$0xff]
        %v729 = vld [vmem:[#allocation4 + $0x8] sm:$0xff]
        %v730 = vld [vmem:[#allocation4 + $0x10] sm:$0xff]
        %v731 = vld [vmem:[#allocation4 + $0x18] sm:$0xff]
        %v732 = vld [vmem:[#allocation4 + $0x20] sm:$0xff]
        %v733 = vld [vmem:[#allocation4 + $0x30] sm:$0xff]
        %v734 = vld [vmem:[#allocation4 + $0x38] sm:$0xff]
        %v735 = vld [vmem:[#allocation4 + $0x40] sm:$0xff]
        %v736 = vld [vmem:[#allocation4 + $0x48] sm:$0xff]
        %v737 = vld [vmem:[#allocation4 + $0x50] sm:$0xff]
        %v738 = vld [vmem:[%s252] sm:$0x11]
        %v739 = vld [vmem:[%s252 + $0x8] sm:$0x11]
        %v742 = vunpack.c.l.b16 %v738
        %v743 = vunpack.c.h.b16 %v738
        %v744 = vunpack.c.l.b16 %v739
        %v745 = vunpack.c.h.b16 %v739
        %v746 = vpack.c.b16 %v742, %v742
        %v747 = vpack.c.b16 %v743, %v743
        %v748 = vpack.c.b16 %v744, %v744
        %v749 = vpack.c.b16 %v745, %v745
        %v751 = vpack.i.b16 %v746, %v746
        %v753 = vlaneseq
        %v754 = vshrl.u32 %v753, 7
        %v755 = vsub.s32 0, %v754
        %v756 = vrot.slane %v751, %v755
        %v758 = vpack.i.b16 %v747, %v747
        %v760 = vlaneseq
        %v761 = vshrl.u32 %v760, 7
        %v762 = vsub.s32 0, %v761
        %v763 = vrot.slane %v758, %v762
        %v765 = vpack.i.b16 %v748, %v748
        %v767 = vlaneseq
        %v768 = vshrl.u32 %v767, 7
        %v769 = vsub.s32 0, %v768
        %v770 = vrot.slane %v765, %v769
        %v772 = vpack.i.b16 %v749, %v749
        %v774 = vlaneseq
        %v775 = vshrl.u32 %v774, 7
        %v776 = vsub.s32 0, %v775
        %v777 = vrot.slane %v772, %v776
        %782 = vrot.lane.b32.xlu0 %v756, 111
        %v783 = vpop.permute.xlu0 %782
        %784 = vrot.lane.b32.xlu0 %v763, 111
        %v785 = vpop.permute.xlu0 %784
        %786 = vrot.lane.b32.xlu0 %v770, 111
        %v787 = vpop.permute.xlu0 %786
        %788 = vrot.lane.b32.xlu0 %v777, 111
        %v789 = vpop.permute.xlu0 %788
        %vm790 = vcmask 908288
        %v791 = vsel %vm790, %v783, %v785
        %v792 = vsel %vm790, %v785, %v787
        %v793 = vsel %vm790, %v787, %v789
        %v799 = vmul.bf16 %v728, %v783
        %v800 = vmul.bf16 %v729, %v791
        %v801 = vmul.bf16 %v730, %v792
        %v802 = vmul.bf16 %v731, %v793
        %v803 = vmul.bf16 %v732, %v789
        %v804 = vmul.bf16 %v733, %v783
        %v805 = vmul.bf16 %v734, %v791
        %v806 = vmul.bf16 %v735, %v792
        %v807 = vmul.bf16 %v736, %v793
        %v808 = vmul.bf16 %v737, %v789
        %819 = vrot.lane.b32.xlu0 %v799, 17
        %v820 = vpop.permute.xlu0 %819
        %821 = vrot.lane.b32.xlu0 %v800, 17
        %v822 = vpop.permute.xlu0 %821
        %823 = vrot.lane.b32.xlu0 %v801, 17
        %v824 = vpop.permute.xlu0 %823
        %825 = vrot.lane.b32.xlu0 %v802, 17
        %v826 = vpop.permute.xlu0 %825
        %827 = vrot.lane.b32.xlu0 %v803, 17
        %v828 = vpop.permute.xlu0 %827
        %829 = vrot.lane.b32.xlu0 %v804, 17
        %v830 = vpop.permute.xlu0 %829
        %831 = vrot.lane.b32.xlu0 %v805, 17
        %v832 = vpop.permute.xlu0 %831
        %833 = vrot.lane.b32.xlu0 %v806, 17
        %v834 = vpop.permute.xlu0 %833
        %835 = vrot.lane.b32.xlu0 %v807, 17
        %v836 = vpop.permute.xlu0 %835
        %837 = vrot.lane.b32.xlu0 %v808, 17
        %v838 = vpop.permute.xlu0 %837
        %vm839 = vcmask 138240
        %v840 = vsel %vm839, %v820, %v822
        %v841 = vsel %vm839, %v822, %v824
        %v842 = vsel %vm839, %v824, %v826
        %v843 = vsel %vm839, %v826, %v828
        %v844 = vsel %vm839, %v830, %v832
        %v845 = vsel %vm839, %v832, %v834
        %v846 = vsel %vm839, %v834, %v836
        %v847 = vsel %vm839, %v836, %v838
        %856 = vst [vmem:[#allocation5] sm:$0xff] %v840
        %857 = vst [vmem:[#allocation5 + $0x8] sm:$0xff] %v841
        %858 = vst [vmem:[#allocation5 + $0x10] sm:$0xff] %v842
        %859 = vst [vmem:[#allocation5 + $0x18] sm:$0xff] %v843
        %860 = vst [vmem:[#allocation5 + $0x20] sm:$0xff] %v844
        %861 = vst [vmem:[#allocation5 + $0x28] sm:$0xff] %v845
        %862 = vst [vmem:[#allocation5 + $0x30] sm:$0xff] %v846
        %863 = vst [vmem:[#allocation5 + $0x38] sm:$0xff] %v847
        %v864 = vld [vmem:[#allocation4] sm:$0xff]
        %v865 = vld [vmem:[#allocation4 + $0x8] sm:$0xff]
        %v866 = vld [vmem:[#allocation4 + $0x10] sm:$0xff]
        %v867 = vld [vmem:[#allocation4 + $0x18] sm:$0xff]
        %v868 = vld [vmem:[#allocation4 + $0x20] sm:$0xff]
        %v869 = vld [vmem:[#allocation4 + $0x30] sm:$0xff]
        %v870 = vld [vmem:[#allocation4 + $0x38] sm:$0xff]
        %v871 = vld [vmem:[#allocation4 + $0x40] sm:$0xff]
        %v872 = vld [vmem:[#allocation4 + $0x48] sm:$0xff]
        %v873 = vld [vmem:[#allocation4 + $0x50] sm:$0xff]
        %v874 = vld [vmem:[%s252] sm:$0x11]
        %v875 = vld [vmem:[%s252 + $0x8] sm:$0x11]
        %v878 = vunpack.c.l.b16 %v874
        %v879 = vunpack.c.h.b16 %v874
        %v880 = vunpack.c.l.b16 %v875
        %v881 = vunpack.c.h.b16 %v875
        %v882 = vpack.c.b16 %v878, %v878
        %v883 = vpack.c.b16 %v879, %v879
        %v884 = vpack.c.b16 %v880, %v880
        %v885 = vpack.c.b16 %v881, %v881
        %v887 = vshrl.u32 %v882, 16
        %v888 = vpack.i.b16 %v887, %v887
        %v890 = vlaneseq
        %v891 = vshrl.u32 %v890, 7
        %v892 = vsub.s32 0, %v891
        %v893 = vrot.slane %v888, %v892
        %v895 = vshrl.u32 %v883, 16
        %v896 = vpack.i.b16 %v895, %v895
        %v898 = vlaneseq
        %v899 = vshrl.u32 %v898, 7
        %v900 = vsub.s32 0, %v899
        %v901 = vrot.slane %v896, %v900
        %v903 = vshrl.u32 %v884, 16
        %v904 = vpack.i.b16 %v903, %v903
        %v906 = vlaneseq
        %v907 = vshrl.u32 %v906, 7
        %v908 = vsub.s32 0, %v907
        %v909 = vrot.slane %v904, %v908
        %v911 = vshrl.u32 %v885, 16
        %v912 = vpack.i.b16 %v911, %v911
        %v914 = vlaneseq
        %v915 = vshrl.u32 %v914, 7
        %v916 = vsub.s32 0, %v915
        %v917 = vrot.slane %v912, %v916
        %922 = vrot.lane.b32.xlu0 %v893, 112
        %v923 = vpop.permute.xlu0 %922
        %924 = vrot.lane.b32.xlu0 %v901, 112
        %v925 = vpop.permute.xlu0 %924
        %926 = vrot.lane.b32.xlu0 %v909, 112
        %v927 = vpop.permute.xlu0 %926
        %928 = vrot.lane.b32.xlu0 %v917, 112
        %v929 = vpop.permute.xlu0 %928
        %vm930 = vcmask 916480
        %v931 = vsel %vm930, %v923, %v925
        %v932 = vsel %vm930, %v925, %v927
        %v933 = vsel %vm930, %v927, %v929
        %v939 = vmul.bf16 %v864, %v923
        %v940 = vmul.bf16 %v865, %v931
        %v941 = vmul.bf16 %v866, %v932
        %v942 = vmul.bf16 %v867, %v933
        %v943 = vmul.bf16 %v868, %v929
        %v944 = vmul.bf16 %v869, %v923
        %v945 = vmul.bf16 %v870, %v931
        %v946 = vmul.bf16 %v871, %v932
        %v947 = vmul.bf16 %v872, %v933
        %v948 = vmul.bf16 %v873, %v929
        %959 = vrot.lane.b32.xlu0 %v939, 16
        %v960 = vpop.permute.xlu0 %959
        %961 = vrot.lane.b32.xlu0 %v940, 16
        %v962 = vpop.permute.xlu0 %961
        %963 = vrot.lane.b32.xlu0 %v941, 16
        %v964 = vpop.permute.xlu0 %963
        %965 = vrot.lane.b32.xlu0 %v942, 16
        %v966 = vpop.permute.xlu0 %965
        %967 = vrot.lane.b32.xlu0 %v943, 16
        %v968 = vpop.permute.xlu0 %967
        %969 = vrot.lane.b32.xlu0 %v944, 16
        %v970 = vpop.permute.xlu0 %969
        %971 = vrot.lane.b32.xlu0 %v945, 16
        %v972 = vpop.permute.xlu0 %971
        %973 = vrot.lane.b32.xlu0 %v946, 16
        %v974 = vpop.permute.xlu0 %973
        %975 = vrot.lane.b32.xlu0 %v947, 16
        %v976 = vpop.permute.xlu0 %975
        %977 = vrot.lane.b32.xlu0 %v948, 16
        %v978 = vpop.permute.xlu0 %977
        %vm979 = vcmask 130048
        %v980 = vsel %vm979, %v960, %v962
        %v981 = vsel %vm979, %v962, %v964
        %v982 = vsel %vm979, %v964, %v966
        %v983 = vsel %vm979, %v966, %v968
        %v984 = vsel %vm979, %v970, %v972
        %v985 = vsel %vm979, %v972, %v974
        %v986 = vsel %vm979, %v974, %v976
        %v987 = vsel %vm979, %v976, %v978
        %996 = vst [vmem:[#allocation5 + $0x40] sm:$0xff] %v980
        %997 = vst [vmem:[#allocation5 + $0x48] sm:$0xff] %v981
        %998 = vst [vmem:[#allocation5 + $0x50] sm:$0xff] %v982
        %999 = vst [vmem:[#allocation5 + $0x58] sm:$0xff] %v983
        %1000 = vst [vmem:[#allocation5 + $0x60] sm:$0xff] %v984
        %1001 = vst [vmem:[#allocation5 + $0x68] sm:$0xff] %v985
        %1002 = vst [vmem:[#allocation5 + $0x70] sm:$0xff] %v986
        %1003 = vst [vmem:[#allocation5 + $0x78] sm:$0xff] %v987
        %v1004 = vld [vmem:[#allocation4] sm:$0xff]
        %v1005 = vld [vmem:[#allocation4 + $0x8] sm:$0xff]
        %v1006 = vld [vmem:[#allocation4 + $0x10] sm:$0xff]
        %v1007 = vld [vmem:[#allocation4 + $0x18] sm:$0xff]
        %v1008 = vld [vmem:[#allocation4 + $0x20] sm:$0xff]
        %v1009 = vld [vmem:[#allocation4 + $0x30] sm:$0xff]
        %v1010 = vld [vmem:[#allocation4 + $0x38] sm:$0xff]
        %v1011 = vld [vmem:[#allocation4 + $0x40] sm:$0xff]
        %v1012 = vld [vmem:[#allocation4 + $0x48] sm:$0xff]
        %v1013 = vld [vmem:[#allocation4 + $0x50] sm:$0xff]
        %v1014 = vld [vmem:[%s252] sm:$0x22]
        %v1015 = vld [vmem:[%s252 + $0x8] sm:$0x22]
        %v1018 = vunpack.c.l.b16 %v1014
        %v1019 = vunpack.c.h.b16 %v1014
        %v1020 = vunpack.c.l.b16 %v1015
        %v1021 = vunpack.c.h.b16 %v1015
        %v1022 = vpack.c.b16 %v1018, %v1018
        %v1023 = vpack.c.b16 %v1019, %v1019
        %v1024 = vpack.c.b16 %v1020, %v1020
        %v1025 = vpack.c.b16 %v1021, %v1021
        %v1027 = vpack.i.b16 %v1022, %v1022
        %v1029 = vlaneseq
        %v1030 = vshrl.u32 %v1029, 7
        %v1031 = vsub.s32 1, %v1030
        %v1032 = vrot.slane %v1027, %v1031
        %v1034 = vpack.i.b16 %v1023, %v1023
        %v1036 = vlaneseq
        %v1037 = vshrl.u32 %v1036, 7
        %v1038 = vsub.s32 1, %v1037
        %v1039 = vrot.slane %v1034, %v1038
        %v1041 = vpack.i.b16 %v1024, %v1024
        %v1043 = vlaneseq
        %v1044 = vshrl.u32 %v1043, 7
        %v1045 = vsub.s32 1, %v1044
        %v1046 = vrot.slane %v1041, %v1045
        %v1048 = vpack.i.b16 %v1025, %v1025
        %v1050 = vlaneseq
        %v1051 = vshrl.u32 %v1050, 7
        %v1052 = vsub.s32 1, %v1051
        %v1053 = vrot.slane %v1048, %v1052
        %1058 = vrot.lane.b32.xlu0 %v1032, 113
        %v1059 = vpop.permute.xlu0 %1058
        %1060 = vrot.lane.b32.xlu0 %v1039, 113
        %v1061 = vpop.permute.xlu0 %1060
        %1062 = vrot.lane.b32.xlu0 %v1046, 113
        %v1063 = vpop.permute.xlu0 %1062
        %1064 = vrot.lane.b32.xlu0 %v1053, 113
        %v1065 = vpop.permute.xlu0 %1064
        %vm1066 = vcmask 924672
        %v1067 = vsel %vm1066, %v1059, %v1061
        %v1068 = vsel %vm1066, %v1061, %v1063
        %v1069 = vsel %vm1066, %v1063, %v1065
        %v1075 = vmul.bf16 %v1004, %v1059
        %v1076 = vmul.bf16 %v1005, %v1067
        %v1077 = vmul.bf16 %v1006, %v1068
        %v1078 = vmul.bf16 %v1007, %v1069
        %v1079 = vmul.bf16 %v1008, %v1065
        %v1080 = vmul.bf16 %v1009, %v1059
        %v1081 = vmul.bf16 %v1010, %v1067
        %v1082 = vmul.bf16 %v1011, %v1068
        %v1083 = vmul.bf16 %v1012, %v1069
        %v1084 = vmul.bf16 %v1013, %v1065
        %1095 = vrot.lane.b32.xlu0 %v1075, 15
        %v1096 = vpop.permute.xlu0 %1095
        %1097 = vrot.lane.b32.xlu0 %v1076, 15
        %v1098 = vpop.permute.xlu0 %1097
        %1099 = vrot.lane.b32.xlu0 %v1077, 15
        %v1100 = vpop.permute.xlu0 %1099
        %1101 = vrot.lane.b32.xlu0 %v1078, 15
        %v1102 = vpop.permute.xlu0 %1101
        %1103 = vrot.lane.b32.xlu0 %v1079, 15
        %v1104 = vpop.permute.xlu0 %1103
        %1105 = vrot.lane.b32.xlu0 %v1080, 15
        %v1106 = vpop.permute.xlu0 %1105
        %1107 = vrot.lane.b32.xlu0 %v1081, 15
        %v1108 = vpop.permute.xlu0 %1107
        %1109 = vrot.lane.b32.xlu0 %v1082, 15
        %v1110 = vpop.permute.xlu0 %1109
        %1111 = vrot.lane.b32.xlu0 %v1083, 15
        %v1112 = vpop.permute.xlu0 %1111
        %1113 = vrot.lane.b32.xlu0 %v1084, 15
        %v1114 = vpop.permute.xlu0 %1113
        %vm1115 = vcmask 121856
        %v1116 = vsel %vm1115, %v1096, %v1098
        %v1117 = vsel %vm1115, %v1098, %v1100
        %v1118 = vsel %vm1115, %v1100, %v1102
        %v1119 = vsel %vm1115, %v1102, %v1104
        %v1120 = vsel %vm1115, %v1106, %v1108
        %v1121 = vsel %vm1115, %v1108, %v1110
        %v1122 = vsel %vm1115, %v1110, %v1112
        %v1123 = vsel %vm1115, %v1112, %v1114
        %1132 = vst [vmem:[#allocation5 + $0x80] sm:$0xff] %v1116
        %1133 = vst [vmem:[#allocation5 + $0x88] sm:$0xff] %v1117
        %1134 = vst [vmem:[#allocation5 + $0x90] sm:$0xff] %v1118
        %1135 = vst [vmem:[#allocation5 + $0x98] sm:$0xff] %v1119
        %1136 = vst [vmem:[#allocation5 + $0xa0] sm:$0xff] %v1120
        %1137 = vst [vmem:[#allocation5 + $0xa8] sm:$0xff] %v1121
        %1138 = vst [vmem:[#allocation5 + $0xb0] sm:$0xff] %v1122
        %1139 = vst [vmem:[#allocation5 + $0xb8] sm:$0xff] %v1123
        %v1140 = vld [vmem:[#allocation4] sm:$0xff]
        %v1141 = vld [vmem:[#allocation4 + $0x8] sm:$0xff]
        %v1142 = vld [vmem:[#allocation4 + $0x10] sm:$0xff]
        %v1143 = vld [vmem:[#allocation4 + $0x18] sm:$0xff]
        %v1144 = vld [vmem:[#allocation4 + $0x20] sm:$0xff]
        %v1145 = vld [vmem:[#allocation4 + $0x30] sm:$0xff]
        %v1146 = vld [vmem:[#allocation4 + $0x38] sm:$0xff]
        %v1147 = vld [vmem:[#allocation4 + $0x40] sm:$0xff]
        %v1148 = vld [vmem:[#allocation4 + $0x48] sm:$0xff]
        %v1149 = vld [vmem:[#allocation4 + $0x50] sm:$0xff]
        %v1150 = vld [vmem:[%s252] sm:$0x22]
        %v1151 = vld [vmem:[%s252 + $0x8] sm:$0x22]
        %v1154 = vunpack.c.l.b16 %v1150
        %v1155 = vunpack.c.h.b16 %v1150
        %v1156 = vunpack.c.l.b16 %v1151
        %v1157 = vunpack.c.h.b16 %v1151
        %v1158 = vpack.c.b16 %v1154, %v1154
        %v1159 = vpack.c.b16 %v1155, %v1155
        %v1160 = vpack.c.b16 %v1156, %v1156
        %v1161 = vpack.c.b16 %v1157, %v1157
        %v1163 = vshrl.u32 %v1158, 16
        %v1164 = vpack.i.b16 %v1163, %v1163
        %v1166 = vlaneseq
        %v1167 = vshrl.u32 %v1166, 7
        %v1168 = vsub.s32 1, %v1167
        %v1169 = vrot.slane %v1164, %v1168
        %v1171 = vshrl.u32 %v1159, 16
        %v1172 = vpack.i.b16 %v1171, %v1171
        %v1174 = vlaneseq
        %v1175 = vshrl.u32 %v1174, 7
        %v1176 = vsub.s32 1, %v1175
        %v1177 = vrot.slane %v1172, %v1176
        %v1179 = vshrl.u32 %v1160, 16
        %v1180 = vpack.i.b16 %v1179, %v1179
        %v1182 = vlaneseq
        %v1183 = vshrl.u32 %v1182, 7
        %v1184 = vsub.s32 1, %v1183
        %v1185 = vrot.slane %v1180, %v1184
        %v1187 = vshrl.u32 %v1161, 16
        %v1188 = vpack.i.b16 %v1187, %v1187
        %v1190 = vlaneseq
        %v1191 = vshrl.u32 %v1190, 7
        %v1192 = vsub.s32 1, %v1191
        %v1193 = vrot.slane %v1188, %v1192
        %1198 = vrot.lane.b32.xlu0 %v1169, 127
        %v1199 = vpop.permute.xlu0 %1198
        %1200 = vrot.lane.b32.xlu0 %v1177, 127
        %v1201 = vpop.permute.xlu0 %1200
        %1202 = vrot.lane.b32.xlu0 %v1185, 127
        %v1203 = vpop.permute.xlu0 %1202
        %1204 = vrot.lane.b32.xlu0 %v1193, 127
        %v1205 = vpop.permute.xlu0 %1204
        %vm1206 = vcmask 1039360
        %v1207 = vsel %vm1206, %v1199, %v1201
        %v1208 = vsel %vm1206, %v1201, %v1203
        %v1209 = vsel %vm1206, %v1203, %v1205
        %v1215 = vmul.bf16 %v1140, %v1199
        %v1216 = vmul.bf16 %v1141, %v1207
        %v1217 = vmul.bf16 %v1142, %v1208
        %v1218 = vmul.bf16 %v1143, %v1209
        %v1219 = vmul.bf16 %v1144, %v1205
        %v1220 = vmul.bf16 %v1145, %v1199
        %v1221 = vmul.bf16 %v1146, %v1207
        %v1222 = vmul.bf16 %v1147, %v1208
        %v1223 = vmul.bf16 %v1148, %v1209
        %v1224 = vmul.bf16 %v1149, %v1205
        %1235 = vrot.lane.b32.xlu0 %v1215, 1
        %v1236 = vpop.permute.xlu0 %1235
        %1237 = vrot.lane.b32.xlu0 %v1216, 1
        %v1238 = vpop.permute.xlu0 %1237
        %1239 = vrot.lane.b32.xlu0 %v1217, 1
        %v1240 = vpop.permute.xlu0 %1239
        %1241 = vrot.lane.b32.xlu0 %v1218, 1
        %v1242 = vpop.permute.xlu0 %1241
        %1243 = vrot.lane.b32.xlu0 %v1219, 1
        %v1244 = vpop.permute.xlu0 %1243
        %1245 = vrot.lane.b32.xlu0 %v1220, 1
        %v1246 = vpop.permute.xlu0 %1245
        %1247 = vrot.lane.b32.xlu0 %v1221, 1
        %v1248 = vpop.permute.xlu0 %1247
        %1249 = vrot.lane.b32.xlu0 %v1222, 1
        %v1250 = vpop.permute.xlu0 %1249
        %1251 = vrot.lane.b32.xlu0 %v1223, 1
        %v1252 = vpop.permute.xlu0 %1251
        %1253 = vrot.lane.b32.xlu0 %v1224, 1
        %v1254 = vpop.permute.xlu0 %1253
        %vm1255 = vcmask 7168
        %v1256 = vsel %vm1255, %v1236, %v1238
        %v1257 = vsel %vm1255, %v1238, %v1240
        %v1258 = vsel %vm1255, %v1240, %v1242
        %v1259 = vsel %vm1255, %v1242, %v1244
        %v1260 = vsel %vm1255, %v1246, %v1248
        %v1261 = vsel %vm1255, %v1248, %v1250
        %v1262 = vsel %vm1255, %v1250, %v1252
        %v1263 = vsel %vm1255, %v1252, %v1254
        %1272 = vst [vmem:[#allocation5 + $0xc0] sm:$0xff] %v1256
        %1273 = vst [vmem:[#allocation5 + $0xc8] sm:$0xff] %v1257
        %1274 = vst [vmem:[#allocation5 + $0xd0] sm:$0xff] %v1258
        %1275 = vst [vmem:[#allocation5 + $0xd8] sm:$0xff] %v1259
        %1276 = vst [vmem:[#allocation5 + $0xe0] sm:$0xff] %v1260
        %1277 = vst [vmem:[#allocation5 + $0xe8] sm:$0xff] %v1261
        %1278 = vst [vmem:[#allocation5 + $0xf0] sm:$0xff] %v1262
        %1279 = vst [vmem:[#allocation5 + $0xf8] sm:$0xff] %v1263
        %v1280 = vld [vmem:[#allocation4 + $0x8] sm:$0xff]
        %v1281 = vld [vmem:[#allocation4 + $0x10] sm:$0xff]
        %v1282 = vld [vmem:[#allocation4 + $0x18] sm:$0xff]
        %v1283 = vld [vmem:[#allocation4 + $0x20] sm:$0xff]
        %v1284 = vld [vmem:[#allocation4 + $0x38] sm:$0xff]
        %v1285 = vld [vmem:[#allocation4 + $0x40] sm:$0xff]
        %v1286 = vld [vmem:[#allocation4 + $0x48] sm:$0xff]
        %v1287 = vld [vmem:[#allocation4 + $0x50] sm:$0xff]
        %1288 = vst [vmem:[#allocation5 + $0x100] sm:$0xff] %v1280
        %1289 = vst [vmem:[#allocation5 + $0x108] sm:$0xff] %v1281
        %1290 = vst [vmem:[#allocation5 + $0x110] sm:$0xff] %v1282
        %1291 = vst [vmem:[#allocation5 + $0x118] sm:$0xff] %v1283
        %1292 = vst [vmem:[#allocation5 + $0x120] sm:$0xff] %v1284
        %1293 = vst [vmem:[#allocation5 + $0x128] sm:$0xff] %v1285
        %1294 = vst [vmem:[#allocation5 + $0x130] sm:$0xff] %v1286
        %1295 = vst [vmem:[#allocation5 + $0x138] sm:$0xff] %v1287
        %v1296 = vld [vmem:[#allocation4 + $0x8] sm:$0xff]
        %v1297 = vld [vmem:[#allocation4 + $0x10] sm:$0xff]
        %v1298 = vld [vmem:[#allocation4 + $0x18] sm:$0xff]
        %v1299 = vld [vmem:[#allocation4 + $0x20] sm:$0xff]
        %v1300 = vld [vmem:[#allocation4 + $0x28] sm:$0xff]
        %v1301 = vld [vmem:[#allocation4 + $0x38] sm:$0xff]
        %v1302 = vld [vmem:[#allocation4 + $0x40] sm:$0xff]
        %v1303 = vld [vmem:[#allocation4 + $0x48] sm:$0xff]
        %v1304 = vld [vmem:[#allocation4 + $0x50] sm:$0xff]
        %v1305 = vld [vmem:[#allocation4 + $0x58] sm:$0xff]
        %v1306 = vld [vmem:[%s252] sm:$0x44]
        %v1307 = vld [vmem:[%s252 + $0x8] sm:$0x44]
        %v1310 = vunpack.c.l.b16 %v1306
        %v1311 = vunpack.c.h.b16 %v1306
        %v1312 = vunpack.c.l.b16 %v1307
        %v1313 = vunpack.c.h.b16 %v1307
        %v1314 = vpack.c.b16 %v1310, %v1310
        %v1315 = vpack.c.b16 %v1311, %v1311
        %v1316 = vpack.c.b16 %v1312, %v1312
        %v1317 = vpack.c.b16 %v1313, %v1313
        %v1319 = vshrl.u32 %v1314, 16
        %v1320 = vpack.i.b16 %v1319, %v1319
        %v1322 = vlaneseq
        %v1323 = vshrl.u32 %v1322, 7
        %v1324 = vsub.s32 2, %v1323
        %v1325 = vrot.slane %v1320, %v1324
        %v1327 = vshrl.u32 %v1315, 16
        %v1328 = vpack.i.b16 %v1327, %v1327
        %v1330 = vlaneseq
        %v1331 = vshrl.u32 %v1330, 7
        %v1332 = vsub.s32 2, %v1331
        %v1333 = vrot.slane %v1328, %v1332
        %v1335 = vshrl.u32 %v1316, 16
        %v1336 = vpack.i.b16 %v1335, %v1335
        %v1338 = vlaneseq
        %v1339 = vshrl.u32 %v1338, 7
        %v1340 = vsub.s32 2, %v1339
        %v1341 = vrot.slane %v1336, %v1340
        %v1343 = vshrl.u32 %v1317, 16
        %v1344 = vpack.i.b16 %v1343, %v1343
        %v1346 = vlaneseq
        %v1347 = vshrl.u32 %v1346, 7
        %v1348 = vsub.s32 2, %v1347
        %v1349 = vrot.slane %v1344, %v1348
        %1354 = vrot.lane.b32.xlu0 %v1325, 1
        %v1355 = vpop.permute.xlu0 %1354
        %1356 = vrot.lane.b32.xlu0 %v1333, 1
        %v1357 = vpop.permute.xlu0 %1356
        %1358 = vrot.lane.b32.xlu0 %v1341, 1
        %v1359 = vpop.permute.xlu0 %1358
        %1360 = vrot.lane.b32.xlu0 %v1349, 1
        %v1361 = vpop.permute.xlu0 %1360
        %v1362 = vsel %vm1255, %v1355, %v1357
        %v1363 = vsel %vm1255, %v1357, %v1359
        %v1364 = vsel %vm1255, %v1359, %v1361
        %v1370 = vmul.bf16 %v1296, %v1355
        %v1371 = vmul.bf16 %v1297, %v1362
        %v1372 = vmul.bf16 %v1298, %v1363
        %v1373 = vmul.bf16 %v1299, %v1364
        %v1374 = vmul.bf16 %v1300, %v1361
        %v1375 = vmul.bf16 %v1301, %v1355
        %v1376 = vmul.bf16 %v1302, %v1362
        %v1377 = vmul.bf16 %v1303, %v1363
        %v1378 = vmul.bf16 %v1304, %v1364
        %v1379 = vmul.bf16 %v1305, %v1361
        %1390 = vrot.lane.b32.xlu0 %v1370, 127
        %v1391 = vpop.permute.xlu0 %1390
        %1392 = vrot.lane.b32.xlu0 %v1371, 127
        %v1393 = vpop.permute.xlu0 %1392
        %1394 = vrot.lane.b32.xlu0 %v1372, 127
        %v1395 = vpop.permute.xlu0 %1394
        %1396 = vrot.lane.b32.xlu0 %v1373, 127
        %v1397 = vpop.permute.xlu0 %1396
        %1398 = vrot.lane.b32.xlu0 %v1374, 127
        %v1399 = vpop.permute.xlu0 %1398
        %1400 = vrot.lane.b32.xlu0 %v1375, 127
        %v1401 = vpop.permute.xlu0 %1400
        %1402 = vrot.lane.b32.xlu0 %v1376, 127
        %v1403 = vpop.permute.xlu0 %1402
        %1404 = vrot.lane.b32.xlu0 %v1377, 127
        %v1405 = vpop.permute.xlu0 %1404
        %1406 = vrot.lane.b32.xlu0 %v1378, 127
        %v1407 = vpop.permute.xlu0 %1406
        %1408 = vrot.lane.b32.xlu0 %v1379, 127
        %v1409 = vpop.permute.xlu0 %1408
        %v1410 = vsel %vm1206, %v1391, %v1393
        %v1411 = vsel %vm1206, %v1393, %v1395
        %v1412 = vsel %vm1206, %v1395, %v1397
        %v1413 = vsel %vm1206, %v1397, %v1399
        %v1414 = vsel %vm1206, %v1401, %v1403
        %v1415 = vsel %vm1206, %v1403, %v1405
        %v1416 = vsel %vm1206, %v1405, %v1407
        %v1417 = vsel %vm1206, %v1407, %v1409
        %1426 = vst [vmem:[#allocation5 + $0x140] sm:$0xff] %v1410
        %1427 = vst [vmem:[#allocation5 + $0x148] sm:$0xff] %v1411
        %1428 = vst [vmem:[#allocation5 + $0x150] sm:$0xff] %v1412
        %1429 = vst [vmem:[#allocation5 + $0x158] sm:$0xff] %v1413
        %1430 = vst [vmem:[#allocation5 + $0x160] sm:$0xff] %v1414
        %1431 = vst [vmem:[#allocation5 + $0x168] sm:$0xff] %v1415
        %1432 = vst [vmem:[#allocation5 + $0x170] sm:$0xff] %v1416
        %1433 = vst [vmem:[#allocation5 + $0x178] sm:$0xff] %v1417
        %v1434 = vld [vmem:[#allocation4 + $0x8] sm:$0xff]
        %v1435 = vld [vmem:[#allocation4 + $0x10] sm:$0xff]
        %v1436 = vld [vmem:[#allocation4 + $0x18] sm:$0xff]
        %v1437 = vld [vmem:[#allocation4 + $0x20] sm:$0xff]
        %v1438 = vld [vmem:[#allocation4 + $0x28] sm:$0xff]
        %v1439 = vld [vmem:[#allocation4 + $0x38] sm:$0xff]
        %v1440 = vld [vmem:[#allocation4 + $0x40] sm:$0xff]
        %v1441 = vld [vmem:[#allocation4 + $0x48] sm:$0xff]
        %v1442 = vld [vmem:[#allocation4 + $0x50] sm:$0xff]
        %v1443 = vld [vmem:[#allocation4 + $0x58] sm:$0xff]
        %v1444 = vld [vmem:[%s252] sm:$0x88]
        %v1445 = vld [vmem:[%s252 + $0x8] sm:$0x88]
        %v1448 = vunpack.c.l.b16 %v1444
        %v1449 = vunpack.c.h.b16 %v1444
        %v1450 = vunpack.c.l.b16 %v1445
        %v1451 = vunpack.c.h.b16 %v1445
        %v1452 = vpack.c.b16 %v1448, %v1448
        %v1453 = vpack.c.b16 %v1449, %v1449
        %v1454 = vpack.c.b16 %v1450, %v1450
        %v1455 = vpack.c.b16 %v1451, %v1451
        %v1457 = vpack.i.b16 %v1452, %v1452
        %v1459 = vlaneseq
        %v1460 = vshrl.u32 %v1459, 7
        %v1461 = vsub.s32 3, %v1460
        %v1462 = vrot.slane %v1457, %v1461
        %v1464 = vpack.i.b16 %v1453, %v1453
        %v1466 = vlaneseq
        %v1467 = vshrl.u32 %v1466, 7
        %v1468 = vsub.s32 3, %v1467
        %v1469 = vrot.slane %v1464, %v1468
        %v1471 = vpack.i.b16 %v1454, %v1454
        %v1473 = vlaneseq
        %v1474 = vshrl.u32 %v1473, 7
        %v1475 = vsub.s32 3, %v1474
        %v1476 = vrot.slane %v1471, %v1475
        %v1478 = vpack.i.b16 %v1455, %v1455
        %v1480 = vlaneseq
        %v1481 = vshrl.u32 %v1480, 7
        %v1482 = vsub.s32 3, %v1481
        %v1483 = vrot.slane %v1478, %v1482
        %1488 = vrot.lane.b32.xlu0 %v1462, 15
        %v1489 = vpop.permute.xlu0 %1488
        %1490 = vrot.lane.b32.xlu0 %v1469, 15
        %v1491 = vpop.permute.xlu0 %1490
        %1492 = vrot.lane.b32.xlu0 %v1476, 15
        %v1493 = vpop.permute.xlu0 %1492
        %1494 = vrot.lane.b32.xlu0 %v1483, 15
        %v1495 = vpop.permute.xlu0 %1494
        %v1496 = vsel %vm1115, %v1489, %v1491
        %v1497 = vsel %vm1115, %v1491, %v1493
        %v1498 = vsel %vm1115, %v1493, %v1495
        %v1504 = vmul.bf16 %v1434, %v1489
        %v1505 = vmul.bf16 %v1435, %v1496
        %v1506 = vmul.bf16 %v1436, %v1497
        %v1507 = vmul.bf16 %v1437, %v1498
        %v1508 = vmul.bf16 %v1438, %v1495
        %v1509 = vmul.bf16 %v1439, %v1489
        %v1510 = vmul.bf16 %v1440, %v1496
        %v1511 = vmul.bf16 %v1441, %v1497
        %v1512 = vmul.bf16 %v1442, %v1498
        %v1513 = vmul.bf16 %v1443, %v1495
        %1524 = vrot.lane.b32.xlu0 %v1504, 113
        %v1525 = vpop.permute.xlu0 %1524
        %1526 = vrot.lane.b32.xlu0 %v1505, 113
        %v1527 = vpop.permute.xlu0 %1526
        %1528 = vrot.lane.b32.xlu0 %v1506, 113
        %v1529 = vpop.permute.xlu0 %1528
        %1530 = vrot.lane.b32.xlu0 %v1507, 113
        %v1531 = vpop.permute.xlu0 %1530
        %1532 = vrot.lane.b32.xlu0 %v1508, 113
        %v1533 = vpop.permute.xlu0 %1532
        %1534 = vrot.lane.b32.xlu0 %v1509, 113
        %v1535 = vpop.permute.xlu0 %1534
        %1536 = vrot.lane.b32.xlu0 %v1510, 113
        %v1537 = vpop.permute.xlu0 %1536
        %1538 = vrot.lane.b32.xlu0 %v1511, 113
        %v1539 = vpop.permute.xlu0 %1538
        %1540 = vrot.lane.b32.xlu0 %v1512, 113
        %v1541 = vpop.permute.xlu0 %1540
        %1542 = vrot.lane.b32.xlu0 %v1513, 113
        %v1543 = vpop.permute.xlu0 %1542
        %v1544 = vsel %vm1066, %v1525, %v1527
        %v1545 = vsel %vm1066, %v1527, %v1529
        %v1546 = vsel %vm1066, %v1529, %v1531
        %v1547 = vsel %vm1066, %v1531, %v1533
        %v1548 = vsel %vm1066, %v1535, %v1537
        %v1549 = vsel %vm1066, %v1537, %v1539
        %v1550 = vsel %vm1066, %v1539, %v1541
        %v1551 = vsel %vm1066, %v1541, %v1543
        %1560 = vst [vmem:[#allocation5 + $0x180] sm:$0xff] %v1544
        %1561 = vst [vmem:[#allocation5 + $0x188] sm:$0xff] %v1545
        %1562 = vst [vmem:[#allocation5 + $0x190] sm:$0xff] %v1546
        %1563 = vst [vmem:[#allocation5 + $0x198] sm:$0xff] %v1547
        %1564 = vst [vmem:[#allocation5 + $0x1a0] sm:$0xff] %v1548
        %1565 = vst [vmem:[#allocation5 + $0x1a8] sm:$0xff] %v1549
        %1566 = vst [vmem:[#allocation5 + $0x1b0] sm:$0xff] %v1550
        %1567 = vst [vmem:[#allocation5 + $0x1b8] sm:$0xff] %v1551
        %v1568 = vld [vmem:[#allocation4 + $0x8] sm:$0xff]
        %v1569 = vld [vmem:[#allocation4 + $0x10] sm:$0xff]
        %v1570 = vld [vmem:[#allocation4 + $0x18] sm:$0xff]
        %v1571 = vld [vmem:[#allocation4 + $0x20] sm:$0xff]
        %v1572 = vld [vmem:[#allocation4 + $0x28] sm:$0xff]
        %v1573 = vld [vmem:[#allocation4 + $0x38] sm:$0xff]
        %v1574 = vld [vmem:[#allocation4 + $0x40] sm:$0xff]
        %v1575 = vld [vmem:[#allocation4 + $0x48] sm:$0xff]
        %v1576 = vld [vmem:[#allocation4 + $0x50] sm:$0xff]
        %v1577 = vld [vmem:[#allocation4 + $0x58] sm:$0xff]
        %v1578 = vld [vmem:[%s252] sm:$0x88]
        %v1579 = vld [vmem:[%s252 + $0x8] sm:$0x88]
        %v1582 = vunpack.c.l.b16 %v1578
        %v1583 = vunpack.c.h.b16 %v1578
        %v1584 = vunpack.c.l.b16 %v1579
        %v1585 = vunpack.c.h.b16 %v1579
        %v1586 = vpack.c.b16 %v1582, %v1582
        %v1587 = vpack.c.b16 %v1583, %v1583
        %v1588 = vpack.c.b16 %v1584, %v1584
        %v1589 = vpack.c.b16 %v1585, %v1585
        %v1591 = vshrl.u32 %v1586, 16
        %v1592 = vpack.i.b16 %v1591, %v1591
        %v1594 = vlaneseq
        %v1595 = vshrl.u32 %v1594, 7
        %v1596 = vsub.s32 3, %v1595
        %v1597 = vrot.slane %v1592, %v1596
        %v1599 = vshrl.u32 %v1587, 16
        %v1600 = vpack.i.b16 %v1599, %v1599
        %v1602 = vlaneseq
        %v1603 = vshrl.u32 %v1602, 7
        %v1604 = vsub.s32 3, %v1603
        %v1605 = vrot.slane %v1600, %v1604
        %v1607 = vshrl.u32 %v1588, 16
        %v1608 = vpack.i.b16 %v1607, %v1607
        %v1610 = vlaneseq
        %v1611 = vshrl.u32 %v1610, 7
        %v1612 = vsub.s32 3, %v1611
        %v1613 = vrot.slane %v1608, %v1612
        %v1615 = vshrl.u32 %v1589, 16
        %v1616 = vpack.i.b16 %v1615, %v1615
        %v1618 = vlaneseq
        %v1619 = vshrl.u32 %v1618, 7
        %v1620 = vsub.s32 3, %v1619
        %v1621 = vrot.slane %v1616, %v1620
        %1626 = vrot.lane.b32.xlu0 %v1597, 16
        %v1627 = vpop.permute.xlu0 %1626
        %1628 = vrot.lane.b32.xlu0 %v1605, 16
        %v1629 = vpop.permute.xlu0 %1628
        %1630 = vrot.lane.b32.xlu0 %v1613, 16
        %v1631 = vpop.permute.xlu0 %1630
        %1632 = vrot.lane.b32.xlu0 %v1621, 16
        %v1633 = vpop.permute.xlu0 %1632
        %v1634 = vsel %vm979, %v1627, %v1629
        %v1635 = vsel %vm979, %v1629, %v1631
        %v1636 = vsel %vm979, %v1631, %v1633
        %v1642 = vmul.bf16 %v1568, %v1627
        %v1643 = vmul.bf16 %v1569, %v1634
        %v1644 = vmul.bf16 %v1570, %v1635
        %v1645 = vmul.bf16 %v1571, %v1636
        %v1646 = vmul.bf16 %v1572, %v1633
        %v1647 = vmul.bf16 %v1573, %v1627
        %v1648 = vmul.bf16 %v1574, %v1634
        %v1649 = vmul.bf16 %v1575, %v1635
        %v1650 = vmul.bf16 %v1576, %v1636
        %v1651 = vmul.bf16 %v1577, %v1633
        %1662 = vrot.lane.b32.xlu0 %v1642, 112
        %v1663 = vpop.permute.xlu0 %1662
        %1664 = vrot.lane.b32.xlu0 %v1643, 112
        %v1665 = vpop.permute.xlu0 %1664
        %1666 = vrot.lane.b32.xlu0 %v1644, 112
        %v1667 = vpop.permute.xlu0 %1666
        %1668 = vrot.lane.b32.xlu0 %v1645, 112
        %v1669 = vpop.permute.xlu0 %1668
        %1670 = vrot.lane.b32.xlu0 %v1646, 112
        %v1671 = vpop.permute.xlu0 %1670
        %1672 = vrot.lane.b32.xlu0 %v1647, 112
        %v1673 = vpop.permute.xlu0 %1672
        %1674 = vrot.lane.b32.xlu0 %v1648, 112
        %v1675 = vpop.permute.xlu0 %1674
        %1676 = vrot.lane.b32.xlu0 %v1649, 112
        %v1677 = vpop.permute.xlu0 %1676
        %1678 = vrot.lane.b32.xlu0 %v1650, 112
        %v1679 = vpop.permute.xlu0 %1678
        %1680 = vrot.lane.b32.xlu0 %v1651, 112
        %v1681 = vpop.permute.xlu0 %1680
        %v1682 = vsel %vm930, %v1663, %v1665
        %v1683 = vsel %vm930, %v1665, %v1667
        %v1684 = vsel %vm930, %v1667, %v1669
        %v1685 = vsel %vm930, %v1669, %v1671
        %v1686 = vsel %vm930, %v1673, %v1675
        %v1687 = vsel %vm930, %v1675, %v1677
        %v1688 = vsel %vm930, %v1677, %v1679
        %v1689 = vsel %vm930, %v1679, %v1681
        %1698 = vst [vmem:[#allocation5 + $0x1c0] sm:$0xff] %v1682
        %1699 = vst [vmem:[#allocation5 + $0x1c8] sm:$0xff] %v1683
        %1700 = vst [vmem:[#allocation5 + $0x1d0] sm:$0xff] %v1684
        %1701 = vst [vmem:[#allocation5 + $0x1d8] sm:$0xff] %v1685
        %1702 = vst [vmem:[#allocation5 + $0x1e0] sm:$0xff] %v1686
        %1703 = vst [vmem:[#allocation5 + $0x1e8] sm:$0xff] %v1687
        %1704 = vst [vmem:[#allocation5 + $0x1f0] sm:$0xff] %v1688
        %1705 = vst [vmem:[#allocation5 + $0x1f8] sm:$0xff] %v1689
        %v1706 = vld [vmem:[#allocation4 + $0x8] sm:$0xff]
        %v1707 = vld [vmem:[#allocation4 + $0x10] sm:$0xff]
        %v1708 = vld [vmem:[#allocation4 + $0x18] sm:$0xff]
        %v1709 = vld [vmem:[#allocation4 + $0x20] sm:$0xff]
        %v1710 = vld [vmem:[#allocation4 + $0x28] sm:$0xff]
        %v1711 = vld [vmem:[#allocation4 + $0x38] sm:$0xff]
        %v1712 = vld [vmem:[#allocation4 + $0x40] sm:$0xff]
        %v1713 = vld [vmem:[#allocation4 + $0x48] sm:$0xff]
        %v1714 = vld [vmem:[#allocation4 + $0x50] sm:$0xff]
        %v1715 = vld [vmem:[#allocation4 + $0x58] sm:$0xff]
        %v1716 = vld [vmem:[%s252 + $0x10] sm:$0x11]
        %v1717 = vld [vmem:[%s252 + $0x18] sm:$0x11]
        %v1720 = vunpack.c.l.b16 %v1716
        %v1721 = vunpack.c.h.b16 %v1716
        %v1722 = vunpack.c.l.b16 %v1717
        %v1723 = vunpack.c.h.b16 %v1717
        %v1724 = vpack.c.b16 %v1720, %v1720
        %v1725 = vpack.c.b16 %v1721, %v1721
        %v1726 = vpack.c.b16 %v1722, %v1722
        %v1727 = vpack.c.b16 %v1723, %v1723
        %v1729 = vpack.i.b16 %v1724, %v1724
        %v1731 = vlaneseq
        %v1732 = vshrl.u32 %v1731, 7
        %v1733 = vsub.s32 0, %v1732
        %v1734 = vrot.slane %v1729, %v1733
        %v1736 = vpack.i.b16 %v1725, %v1725
        %v1738 = vlaneseq
        %v1739 = vshrl.u32 %v1738, 7
        %v1740 = vsub.s32 0, %v1739
        %v1741 = vrot.slane %v1736, %v1740
        %v1743 = vpack.i.b16 %v1726, %v1726
        %v1745 = vlaneseq
        %v1746 = vshrl.u32 %v1745, 7
        %v1747 = vsub.s32 0, %v1746
        %v1748 = vrot.slane %v1743, %v1747
        %v1750 = vpack.i.b16 %v1727, %v1727
        %v1752 = vlaneseq
        %v1753 = vshrl.u32 %v1752, 7
        %v1754 = vsub.s32 0, %v1753
        %v1755 = vrot.slane %v1750, %v1754
        %1760 = vrot.lane.b32.xlu0 %v1734, 17
        %v1761 = vpop.permute.xlu0 %1760
        %1762 = vrot.lane.b32.xlu0 %v1741, 17
        %v1763 = vpop.permute.xlu0 %1762
        %1764 = vrot.lane.b32.xlu0 %v1748, 17
        %v1765 = vpop.permute.xlu0 %1764
        %1766 = vrot.lane.b32.xlu0 %v1755, 17
        %v1767 = vpop.permute.xlu0 %1766
        %v1768 = vsel %vm839, %v1761, %v1763
        %v1769 = vsel %vm839, %v1763, %v1765
        %v1770 = vsel %vm839, %v1765, %v1767
        %v1776 = vmul.bf16 %v1706, %v1761
        %v1777 = vmul.bf16 %v1707, %v1768
        %v1778 = vmul.bf16 %v1708, %v1769
        %v1779 = vmul.bf16 %v1709, %v1770
        %v1780 = vmul.bf16 %v1710, %v1767
        %v1781 = vmul.bf16 %v1711, %v1761
        %v1782 = vmul.bf16 %v1712, %v1768
        %v1783 = vmul.bf16 %v1713, %v1769
        %v1784 = vmul.bf16 %v1714, %v1770
        %v1785 = vmul.bf16 %v1715, %v1767
        %1796 = vrot.lane.b32.xlu0 %v1776, 111
        %v1797 = vpop.permute.xlu0 %1796
        %1798 = vrot.lane.b32.xlu0 %v1777, 111
        %v1799 = vpop.permute.xlu0 %1798
        %1800 = vrot.lane.b32.xlu0 %v1778, 111
        %v1801 = vpop.permute.xlu0 %1800
        %1802 = vrot.lane.b32.xlu0 %v1779, 111
        %v1803 = vpop.permute.xlu0 %1802
        %1804 = vrot.lane.b32.xlu0 %v1780, 111
        %v1805 = vpop.permute.xlu0 %1804
        %1806 = vrot.lane.b32.xlu0 %v1781, 111
        %v1807 = vpop.permute.xlu0 %1806
        %1808 = vrot.lane.b32.xlu0 %v1782, 111
        %v1809 = vpop.permute.xlu0 %1808
        %1810 = vrot.lane.b32.xlu0 %v1783, 111
        %v1811 = vpop.permute.xlu0 %1810
        %1812 = vrot.lane.b32.xlu0 %v1784, 111
        %v1813 = vpop.permute.xlu0 %1812
        %1814 = vrot.lane.b32.xlu0 %v1785, 111
        %v1815 = vpop.permute.xlu0 %1814
        %v1816 = vsel %vm790, %v1797, %v1799
        %v1817 = vsel %vm790, %v1799, %v1801
        %v1818 = vsel %vm790, %v1801, %v1803
        %v1819 = vsel %vm790, %v1803, %v1805
        %v1820 = vsel %vm790, %v1807, %v1809
        %v1821 = vsel %vm790, %v1809, %v1811
        %v1822 = vsel %vm790, %v1811, %v1813
        %v1823 = vsel %vm790, %v1813, %v1815
        %1832 = vst [vmem:[#allocation5 + $0x200] sm:$0xff] %v1816
        %1833 = vst [vmem:[#allocation5 + $0x208] sm:$0xff] %v1817
        %1834 = vst [vmem:[#allocation5 + $0x210] sm:$0xff] %v1818
        %1835 = vst [vmem:[#allocation5 + $0x218] sm:$0xff] %v1819
        %1836 = vst [vmem:[#allocation5 + $0x220] sm:$0xff] %v1820
        %1837 = vst [vmem:[#allocation5 + $0x228] sm:$0xff] %v1821
        %1838 = vst [vmem:[#allocation5 + $0x230] sm:$0xff] %v1822
        %1839 = vst [vmem:[#allocation5 + $0x238] sm:$0xff] %v1823
        %v1840 = vld [vmem:[#allocation6] sm:$0xff]
        %v1841 = vld [vmem:[#allocation6 + $0x8] sm:$0xf]
        %v1842 = vld [vmem:[#allocation6 + $0xc] sm:$0xff]
        %v1843 = vld [vmem:[#allocation6 + $0x14] sm:$0xf]
        %v1844 = vld [vmem:[#allocation6 + $0x18] sm:$0xff]
        %v1845 = vld [vmem:[#allocation6 + $0x20] sm:$0xf]
        %v1846 = vld [vmem:[#allocation6 + $0x24] sm:$0xff]
        %v1847 = vld [vmem:[#allocation6 + $0x2c] sm:$0xf]
        %v1848 = vld [vmem:[#allocation5] sm:$0xff]
        %v1849 = vld [vmem:[#allocation5 + $0x8] sm:$0xff]
        %v1850 = vld [vmem:[#allocation5 + $0x10] sm:$0xff]
        %v1851 = vld [vmem:[#allocation5 + $0x18] sm:$0xff]
        %v1852 = vld [vmem:[#allocation5 + $0x20] sm:$0xff]
        %v1853 = vld [vmem:[#allocation5 + $0x28] sm:$0xff]
        %v1854 = vld [vmem:[#allocation5 + $0x30] sm:$0xff]
        %v1855 = vld [vmem:[#allocation5 + $0x38] sm:$0xff]
        %v1856 = vld [vmem:[#allocation5 + $0x40] sm:$0xff]
        %v1857 = vld [vmem:[#allocation5 + $0x48] sm:$0xff]
        %v1858 = vld [vmem:[#allocation5 + $0x50] sm:$0xff]
        %v1859 = vld [vmem:[#allocation5 + $0x58] sm:$0xff]
        %v1860 = vld [vmem:[#allocation5 + $0x60] sm:$0xff]
        %v1861 = vld [vmem:[#allocation5 + $0x68] sm:$0xff]
        %v1862 = vld [vmem:[#allocation5 + $0x70] sm:$0xff]
        %v1863 = vld [vmem:[#allocation5 + $0x78] sm:$0xff]
        %v1864 = vld [vmem:[#allocation5 + $0x80] sm:$0xff]
        %v1865 = vld [vmem:[#allocation5 + $0x88] sm:$0xff]
        %v1866 = vld [vmem:[#allocation5 + $0x90] sm:$0xff]
        %v1867 = vld [vmem:[#allocation5 + $0x98] sm:$0xff]
        %v1868 = vld [vmem:[#allocation5 + $0xa0] sm:$0xff]
        %v1869 = vld [vmem:[#allocation5 + $0xa8] sm:$0xff]
        %v1870 = vld [vmem:[#allocation5 + $0xb0] sm:$0xff]
        %v1871 = vld [vmem:[#allocation5 + $0xb8] sm:$0xff]
        %v1872 = vld [vmem:[#allocation5 + $0xc0] sm:$0xff]
        %v1873 = vld [vmem:[#allocation5 + $0xc8] sm:$0xff]
        %v1874 = vld [vmem:[#allocation5 + $0xd0] sm:$0xff]
        %v1875 = vld [vmem:[#allocation5 + $0xd8] sm:$0xff]
        %v1876 = vld [vmem:[#allocation5 + $0xe0] sm:$0xff]
        %v1877 = vld [vmem:[#allocation5 + $0xe8] sm:$0xff]
        %v1878 = vld [vmem:[#allocation5 + $0xf0] sm:$0xff]
        %v1879 = vld [vmem:[#allocation5 + $0xf8] sm:$0xff]
        %v1880 = vld [vmem:[#allocation5 + $0x100] sm:$0xff]
        %v1881 = vld [vmem:[#allocation5 + $0x108] sm:$0xff]
        %v1882 = vld [vmem:[#allocation5 + $0x110] sm:$0xff]
        %v1883 = vld [vmem:[#allocation5 + $0x118] sm:$0xff]
        %v1884 = vld [vmem:[#allocation5 + $0x120] sm:$0xff]
        %v1885 = vld [vmem:[#allocation5 + $0x128] sm:$0xff]
        %v1886 = vld [vmem:[#allocation5 + $0x130] sm:$0xff]
        %v1887 = vld [vmem:[#allocation5 + $0x138] sm:$0xff]
        %v1888 = vld [vmem:[#allocation5 + $0x140] sm:$0xff]
        %v1889 = vld [vmem:[#allocation5 + $0x148] sm:$0xff]
        %v1890 = vld [vmem:[#allocation5 + $0x150] sm:$0xff]
        %v1891 = vld [vmem:[#allocation5 + $0x158] sm:$0xff]
        %v1892 = vld [vmem:[#allocation5 + $0x160] sm:$0xff]
        %v1893 = vld [vmem:[#allocation5 + $0x168] sm:$0xff]
        %v1894 = vld [vmem:[#allocation5 + $0x170] sm:$0xff]
        %v1895 = vld [vmem:[#allocation5 + $0x178] sm:$0xff]
        %v1896 = vld [vmem:[#allocation5 + $0x180] sm:$0xff]
        %v1897 = vld [vmem:[#allocation5 + $0x188] sm:$0xff]
        %v1898 = vld [vmem:[#allocation5 + $0x190] sm:$0xff]
        %v1899 = vld [vmem:[#allocation5 + $0x198] sm:$0xff]
        %v1900 = vld [vmem:[#allocation5 + $0x1a0] sm:$0xff]
        %v1901 = vld [vmem:[#allocation5 + $0x1a8] sm:$0xff]
        %v1902 = vld [vmem:[#allocation5 + $0x1b0] sm:$0xff]
        %v1903 = vld [vmem:[#allocation5 + $0x1b8] sm:$0xff]
        %v1904 = vld [vmem:[#allocation5 + $0x1c0] sm:$0xff]
        %v1905 = vld [vmem:[#allocation5 + $0x1c8] sm:$0xff]
        %v1906 = vld [vmem:[#allocation5 + $0x1d0] sm:$0xff]
        %v1907 = vld [vmem:[#allocation5 + $0x1d8] sm:$0xff]
        %v1908 = vld [vmem:[#allocation5 + $0x1e0] sm:$0xff]
        %v1909 = vld [vmem:[#allocation5 + $0x1e8] sm:$0xff]
        %v1910 = vld [vmem:[#allocation5 + $0x1f0] sm:$0xff]
        %v1911 = vld [vmem:[#allocation5 + $0x1f8] sm:$0xff]
        %v1912 = vld [vmem:[#allocation5 + $0x200] sm:$0xff]
        %v1913 = vld [vmem:[#allocation5 + $0x208] sm:$0xff]
        %v1914 = vld [vmem:[#allocation5 + $0x210] sm:$0xff]
        %v1915 = vld [vmem:[#allocation5 + $0x218] sm:$0xff]
        %v1916 = vld [vmem:[#allocation5 + $0x220] sm:$0xff]
        %v1917 = vld [vmem:[#allocation5 + $0x228] sm:$0xff]
        %v1918 = vld [vmem:[#allocation5 + $0x230] sm:$0xff]
        %v1919 = vld [vmem:[#allocation5 + $0x238] sm:$0xff]
        %v1928 = vunpack.c.l.b16 %v1840
        %v1929 = vunpack.c.h.b16 %v1840
        %v1930 = vunpack.c.l.b16 %v1841
        %v1931 = vunpack.c.l.b16 %v1842
        %v1932 = vunpack.c.h.b16 %v1842
        %v1933 = vunpack.c.l.b16 %v1843
        %v1934 = vunpack.c.l.b16 %v1844
        %v1935 = vunpack.c.h.b16 %v1844
        %v1936 = vunpack.c.l.b16 %v1845
        %v1937 = vunpack.c.l.b16 %v1846
        %v1938 = vunpack.c.h.b16 %v1846
        %v1939 = vunpack.c.l.b16 %v1847
        %v1940 = vpack.c.b16 %v1931, %v1928
        %v1941 = vpack.c.b16 %v1932, %v1929
        %v1942 = vpack.c.b16 %v1933, %v1930
        %v1943 = vpack.c.b16 %v1937, %v1934
        %v1944 = vpack.c.b16 %v1938, %v1935
        %v1945 = vpack.c.b16 %v1939, %v1936
        %vm1950 = vcmask 261120
        %v1952 = vsel %vm1950, %v1942, 0
        %v1955 = vsel %vm1950, %v1945, 0
        %1957 = vmatprep.subr.bf16.mxu0 %v1849
        %1958 = vmatpush1.bf16.msra.mxu0 %v1848
        %1959 = vmatprep.subr.bf16.mxu0 %v1853
        %1960 = vmatpush1.bf16.msra.mxu0 %v1852
        %1961 = vmatprep.subr.bf16.mxu0 %v1857
        %1962 = vmatpush1.bf16.msra.mxu0 %v1856
        %1963 = vmatprep.subr.bf16.mxu0 %v1861
        %1964 = vmatpush1.bf16.msra.mxu0 %v1860
        %1965 = vmatprep.subr.bf16.mxu0 %v1865
        %1966 = vmatpush1.bf16.msra.mxu0 %v1864
        %1967 = vmatprep.subr.bf16.mxu0 %v1869
        %1968 = vmatpush1.bf16.msra.mxu0 %v1868
        %1969 = vmatprep.subr.bf16.mxu0 %v1873
        %1970 = vmatpush1.bf16.msra.mxu0 %v1872
        %1971 = vmatprep.subr.bf16.mxu0 %v1877
        %1972 = vmatpush1.bf16.msra.mxu0 %v1876
        %1973 = vmatprep.subr.bf16.mxu0 %v1881
        %1974 = vmatpush1.bf16.msra.mxu0 %v1880
        %1975 = vmatprep.subr.bf16.mxu0 %v1885
        %1976 = vmatpush1.bf16.msra.mxu0 %v1884
        %1977 = vmatprep.subr.bf16.mxu0 %v1889
        %1978 = vmatpush1.bf16.msra.mxu0 %v1888
        %1979 = vmatprep.subr.bf16.mxu0 %v1893
        %1980 = vmatpush1.bf16.msra.mxu0 %v1892
        %1981 = vmatprep.subr.bf16.mxu0 %v1897
        %1982 = vmatpush1.bf16.msra.mxu0 %v1896
        %1983 = vmatprep.subr.bf16.mxu0 %v1901
        %1984 = vmatpush1.bf16.msra.mxu0 %v1900
        %1985 = vmatprep.subr.bf16.mxu0 %v1905
        %1986 = vmatpush1.bf16.msra.mxu0 %v1904
        %1987 = vmatprep.subr.bf16.mxu0 %v1909
        %1988 = vmatpush1.bf16.msra.mxu0 %v1908
        %1989 = vmatprep.mubr.bf16.mxu0 %v1941
        %1990 = vmatmul.mubr.bf16.gmra.mrb[0].mxu0 %v1940
        %v1991 = vpop.f32.mrb[0].mxu0
        %v1992 = vadd.f32 0.0, %v1991
        %v1993 = vpop.f32.mrb[0].mxu0
        %v1994 = vadd.f32 0.0, %v1993
        %v1995 = vpop.f32.mrb[0].mxu0
        %v1996 = vadd.f32 0.0, %v1995
        %v1997 = vpop.f32.mrb[0].mxu0
        %v1998 = vadd.f32 0.0, %v1997
        %1999 = vmatprep.mubr.bf16.mxu0 %v1944
        %2000 = vmatmul.mubr.bf16.gmra.mrb[0].mxu0 %v1943
        %v2001 = vpop.f32.mrb[0].mxu0
        %v2002 = vadd.f32 0.0, %v2001
        %v2003 = vpop.f32.mrb[0].mxu0
        %v2004 = vadd.f32 0.0, %v2003
        %v2005 = vpop.f32.mrb[0].mxu0
        %v2006 = vadd.f32 0.0, %v2005
        %v2007 = vpop.f32.mrb[0].mxu0
        %v2008 = vadd.f32 0.0, %v2007
        %2009 = vdwg.mxu0
        %2010 = vmatprep.subr.bf16.mxu0 %v1913
        %2011 = vmatpush1.bf16.msra.mxu0 %v1912
        %2012 = vmatprep.subr.bf16.mxu0 %v1917
        %2013 = vmatpush1.bf16.msra.mxu0 %v1916
        %2014 = vmatprep.subr.bf16.mxu0 0
        %2015 = vmatpush1.bf16.msra.mxu0 0
        %2016 = vmatprep.subr.bf16.mxu0 0
        %2017 = vmatpush1.bf16.msra.mxu0 0
        %2018 = vmatprep.subr.bf16.mxu0 0
        %2019 = vmatpush1.bf16.msra.mxu0 0
        %2020 = vmatprep.subr.bf16.mxu0 0
        %2021 = vmatpush1.bf16.msra.mxu0 0
        %2022 = vmatprep.subr.bf16.mxu0 0
        %2023 = vmatpush1.bf16.msra.mxu0 0
        %2024 = vmatprep.subr.bf16.mxu0 0
        %2025 = vmatpush1.bf16.msra.mxu0 0
        %2026 = vmatprep.subr.bf16.mxu0 0
        %2027 = vmatpush1.bf16.msra.mxu0 0
        %2028 = vmatprep.subr.bf16.mxu0 0
        %2029 = vmatpush1.bf16.msra.mxu0 0
        %2030 = vmatprep.subr.bf16.mxu0 0
        %2031 = vmatpush1.bf16.msra.mxu0 0
        %2032 = vmatprep.subr.bf16.mxu0 0
        %2033 = vmatpush1.bf16.msra.mxu0 0
        %2034 = vmatprep.subr.bf16.mxu0 0
        %2035 = vmatpush1.bf16.msra.mxu0 0
        %2036 = vmatprep.subr.bf16.mxu0 0
        %2037 = vmatpush1.bf16.msra.mxu0 0
        %2038 = vmatprep.subr.bf16.mxu0 0
        %2039 = vmatpush1.bf16.msra.mxu0 0
        %2040 = vmatprep.subr.bf16.mxu0 0
        %2041 = vmatpush1.bf16.msra.mxu0 0
        %2042 = vmatprep.mubr.bf16.mxu0 0
        %2043 = vmatmul.mubr.bf16.gmra.mrb[0].mxu0 %v1952
        %v2044 = vpop.f32.mrb[0].mxu0
        %v2045 = vadd.f32 %v1992, %v2044
        %v2046 = vpop.f32.mrb[0].mxu0
        %v2047 = vadd.f32 %v1994, %v2046
        %v2048 = vpop.f32.mrb[0].mxu0
        %v2049 = vadd.f32 %v1996, %v2048
        %v2050 = vpop.f32.mrb[0].mxu0
        %v2051 = vadd.f32 %v1998, %v2050
        %2052 = vmatprep.mubr.bf16.mxu0 0
        %2053 = vmatmul.mubr.bf16.gmra.mrb[0].mxu0 %v1955
        %v2054 = vpop.f32.mrb[0].mxu0
        %v2055 = vadd.f32 %v2002, %v2054
        %v2056 = vpop.f32.mrb[0].mxu0
        %v2057 = vadd.f32 %v2004, %v2056
        %v2058 = vpop.f32.mrb[0].mxu0
        %v2059 = vadd.f32 %v2006, %v2058
        %v2060 = vpop.f32.mrb[0].mxu0
        %v2061 = vadd.f32 %v2008, %v2060
        %2062 = vdwg.mxu0
        %2063 = vmatprep.subr.bf16.mxu0 %v1851
        %2064 = vmatpush1.bf16.msra.mxu0 %v1850
        %2065 = vmatprep.subr.bf16.mxu0 %v1855
        %2066 = vmatpush1.bf16.msra.mxu0 %v1854
        %2067 = vmatprep.subr.bf16.mxu0 %v1859
        %2068 = vmatpush1.bf16.msra.mxu0 %v1858
        %2069 = vmatprep.subr.bf16.mxu0 %v1863
        %2070 = vmatpush1.bf16.msra.mxu0 %v1862
        %2071 = vmatprep.subr.bf16.mxu0 %v1867
        %2072 = vmatpush1.bf16.msra.mxu0 %v1866
        %2073 = vmatprep.subr.bf16.mxu0 %v1871
        %2074 = vmatpush1.bf16.msra.mxu0 %v1870
        %2075 = vmatprep.subr.bf16.mxu0 %v1875
        %2076 = vmatpush1.bf16.msra.mxu0 %v1874
        %2077 = vmatprep.subr.bf16.mxu0 %v1879
        %2078 = vmatpush1.bf16.msra.mxu0 %v1878
        %2079 = vmatprep.subr.bf16.mxu0 %v1883
        %2080 = vmatpush1.bf16.msra.mxu0 %v1882
        %2081 = vmatprep.subr.bf16.mxu0 %v1887
        %2082 = vmatpush1.bf16.msra.mxu0 %v1886
        %2083 = vmatprep.subr.bf16.mxu0 %v1891
        %2084 = vmatpush1.bf16.msra.mxu0 %v1890
        %2085 = vmatprep.subr.bf16.mxu0 %v1895
        %2086 = vmatpush1.bf16.msra.mxu0 %v1894
        %2087 = vmatprep.subr.bf16.mxu0 %v1899
        %2088 = vmatpush1.bf16.msra.mxu0 %v1898
        %2089 = vmatprep.subr.bf16.mxu0 %v1903
        %2090 = vmatpush1.bf16.msra.mxu0 %v1902
        %2091 = vmatprep.subr.bf16.mxu0 %v1907
        %2092 = vmatpush1.bf16.msra.mxu0 %v1906
        %2093 = vmatprep.subr.bf16.mxu0 %v1911
        %2094 = vmatpush1.bf16.msra.mxu0 %v1910
        %2095 = vmatprep.mubr.bf16.mxu0 %v1941
        %2096 = vmatmul.mubr.bf16.gmra.mrb[0].mxu0 %v1940
        %v2097 = vpop.f32.mrb[0].mxu0
        %v2098 = vadd.f32 0.0, %v2097
        %v2099 = vpop.f32.mrb[0].mxu0
        %v2100 = vadd.f32 0.0, %v2099
        %v2101 = vpop.f32.mrb[0].mxu0
        %v2102 = vadd.f32 0.0, %v2101
        %v2103 = vpop.f32.mrb[0].mxu0
        %v2104 = vadd.f32 0.0, %v2103
        %2105 = vmatprep.mubr.bf16.mxu0 %v1944
        %2106 = vmatmul.mubr.bf16.gmra.mrb[0].mxu0 %v1943
        %v2107 = vpop.f32.mrb[0].mxu0
        %v2108 = vadd.f32 0.0, %v2107
        %v2109 = vpop.f32.mrb[0].mxu0
        %v2110 = vadd.f32 0.0, %v2109
        %v2111 = vpop.f32.mrb[0].mxu0
        %v2112 = vadd.f32 0.0, %v2111
        %v2113 = vpop.f32.mrb[0].mxu0
        %v2114 = vadd.f32 0.0, %v2113
        %2115 = vdwg.mxu0
        %2116 = vmatprep.subr.bf16.mxu0 %v1915
        %2117 = vmatpush1.bf16.msra.mxu0 %v1914
        %2118 = vmatprep.subr.bf16.mxu0 %v1919
        %2119 = vmatpush1.bf16.msra.mxu0 %v1918
        %2120 = vmatprep.subr.bf16.mxu0 0
        %2121 = vmatpush1.bf16.msra.mxu0 0
        %2122 = vmatprep.subr.bf16.mxu0 0
        %2123 = vmatpush1.bf16.msra.mxu0 0
        %2124 = vmatprep.subr.bf16.mxu0 0
        %2125 = vmatpush1.bf16.msra.mxu0 0
        %2126 = vmatprep.subr.bf16.mxu0 0
        %2127 = vmatpush1.bf16.msra.mxu0 0
        %2128 = vmatprep.subr.bf16.mxu0 0
        %2129 = vmatpush1.bf16.msra.mxu0 0
        %2130 = vmatprep.subr.bf16.mxu0 0
        %2131 = vmatpush1.bf16.msra.mxu0 0
        %2132 = vmatprep.subr.bf16.mxu0 0
        %2133 = vmatpush1.bf16.msra.mxu0 0
        %2134 = vmatprep.subr.bf16.mxu0 0
        %2135 = vmatpush1.bf16.msra.mxu0 0
        %2136 = vmatprep.subr.bf16.mxu0 0
        %2137 = vmatpush1.bf16.msra.mxu0 0
        %2138 = vmatprep.subr.bf16.mxu0 0
        %2139 = vmatpush1.bf16.msra.mxu0 0
        %2140 = vmatprep.subr.bf16.mxu0 0
        %2141 = vmatpush1.bf16.msra.mxu0 0
        %2142 = vmatprep.subr.bf16.mxu0 0
        %2143 = vmatpush1.bf16.msra.mxu0 0
        %2144 = vmatprep.subr.bf16.mxu0 0
        %2145 = vmatpush1.bf16.msra.mxu0 0
        %2146 = vmatprep.subr.bf16.mxu0 0
        %2147 = vmatpush1.bf16.msra.mxu0 0
        %2148 = vmatprep.mubr.bf16.mxu0 0
        %2149 = vmatmul.mubr.bf16.gmra.mrb[0].mxu0 %v1952
        %v2150 = vpop.f32.mrb[0].mxu0
        %v2151 = vadd.f32 %v2098, %v2150
        %v2152 = vpop.f32.mrb[0].mxu0
        %v2153 = vadd.f32 %v2100, %v2152
        %v2154 = vpop.f32.mrb[0].mxu0
        %v2155 = vadd.f32 %v2102, %v2154
        %v2156 = vpop.f32.mrb[0].mxu0
        %v2157 = vadd.f32 %v2104, %v2156
        %2158 = vmatprep.mubr.bf16.mxu0 0
        %2159 = vmatmul.mubr.bf16.gmra.mrb[0].mxu0 %v1955
        %v2160 = vpop.f32.mrb[0].mxu0
        %v2161 = vadd.f32 %v2108, %v2160
        %v2162 = vpop.f32.mrb[0].mxu0
        %v2163 = vadd.f32 %v2110, %v2162
        %v2164 = vpop.f32.mrb[0].mxu0
        %v2165 = vadd.f32 %v2112, %v2164
        %v2166 = vpop.f32.mrb[0].mxu0
        %v2167 = vadd.f32 %v2114, %v2166
        %2168 = vdwg.mxu0
        %2169 = vst [vmem:[%s282] sm:$0xff] %v2045
        %2170 = vst [vmem:[%s282 + $0x8] sm:$0xff] %v2047
        %2171 = vst [vmem:[%s282 + $0x10] sm:$0xff] %v2151
        %2172 = vst [vmem:[%s282 + $0x18] sm:$0xff] %v2153
        %2173 = vst [vmem:[%s282 + $0x20] sm:$0xff] %v2049
        %2174 = vst [vmem:[%s282 + $0x28] sm:$0xff] %v2051
        %2175 = vst [vmem:[%s282 + $0x30] sm:$0xff] %v2155
        %2176 = vst [vmem:[%s282 + $0x38] sm:$0xff] %v2157
        %2177 = vst [vmem:[%s282 + $0x40] sm:$0xff] %v2055
        %2178 = vst [vmem:[%s282 + $0x48] sm:$0xff] %v2057
        %2179 = vst [vmem:[%s282 + $0x50] sm:$0xff] %v2161
        %2180 = vst [vmem:[%s282 + $0x58] sm:$0xff] %v2163
        %2181 = vst [vmem:[%s282 + $0x60] sm:$0xff] %v2059
        %2182 = vst [vmem:[%s282 + $0x68] sm:$0xff] %v2061
        %2183 = vst [vmem:[%s282 + $0x70] sm:$0xff] %v2165
        %2184 = vst [vmem:[%s282 + $0x78] sm:$0xff] %v2167
        %s2185 = sand.u32 %s157, 1
        %s2186 = sand.u32 %s157, 1
        %s2187 = smul.addr %s2186, 128
        %s2188 = scalar_lea.vmem [#allocation10], %s2187
        // Predicated region
        $region65: #{conv2plus1d_forward.1} parent=39 // pred_check
          %p2189 = pneg %p167
        $region66: #{conv2plus1d_forward.1} parent=39 // pred_check_branch
          %2191 = sbr.rel (%p2189) target = $region68
        $region67: #{conv2plus1d_forward.1} parent=39 // pred_region
          %s2192 = smul.u32 4, %s25
          %s2193 = smul.addr %s24, 64
          %s2194 = sadd.s32 %s2192, %s2193
          %s2195 = smul.addr %s2194, 8
          %s2196 = scalar_lea.vmem %s5, %s2195
          // Predicated region
          $region69: #{conv2plus1d_forward.1} parent=67 // pred_check
            _
          $region70: #{conv2plus1d_forward.1} parent=67 // pred_check_branch
            %2198 = sbr.rel (0) target = $region72
          $region71: #{conv2plus1d_forward.1} parent=67 // pred_region
            // Predicated region
            $region73: #{conv2plus1d_forward.1} parent=71 // pred_check
              _
            $region74: #{conv2plus1d_forward.1} parent=71 // pred_check_branch
              %2200 = sbr.rel (0) target = $region76
            $region75: #{conv2plus1d_forward.1} parent=71 // pred_region
              loop: start=0, step=1, limit=1
              $region77: #{conv2plus1d_forward.1} parent=75 // loop_pre_header
                _
              $region78: #{conv2plus1d_forward.1} parent=75 // loop_header
                %s2202 = sphi 0, %s2206
                %p2203 = scmp.ge.s32.totalorder %s2202, 1
                %s2207 = sphi %s2188, %s2188
                %s2208 = sphi %s2196, %s2196
              $region79: #{conv2plus1d_forward.1} parent=75 // loop_header_branch
                %2205 = sbr.rel (%p2203) target = $region83
              $region80: #{conv2plus1d_forward.1} parent=75 // loop_body
                %v2209 = vld [vmem:[%s2207] sm:$0xff]
                %2210 = vst [vmem:[%s2208] sm:$0xff] %v2209
                %v2211 = vld [vmem:[%s2207 + $0x8] sm:$0xff]
                %2212 = vst [vmem:[%s2208 + $0x8] sm:$0xff] %v2211
                %v2213 = vld [vmem:[%s2207 + $0x10] sm:$0xff]
                %2214 = vst [vmem:[%s2208 + $0x10] sm:$0xff] %v2213
                %v2215 = vld [vmem:[%s2207 + $0x18] sm:$0xff]
                %2216 = vst [vmem:[%s2208 + $0x18] sm:$0xff] %v2215
                %v2217 = vld [vmem:[%s2207 + $0x20] sm:$0xff]
                %2218 = vst [vmem:[%s2208 + $0x80] sm:$0xff] %v2217
                %v2219 = vld [vmem:[%s2207 + $0x28] sm:$0xff]
                %2220 = vst [vmem:[%s2208 + $0x88] sm:$0xff] %v2219
                %v2221 = vld [vmem:[%s2207 + $0x30] sm:$0xff]
                %2222 = vst [vmem:[%s2208 + $0x90] sm:$0xff] %v2221
                %v2223 = vld [vmem:[%s2207 + $0x38] sm:$0xff]
                %2224 = vst [vmem:[%s2208 + $0x98] sm:$0xff] %v2223
                %v2225 = vld [vmem:[%s2207 + $0x40] sm:$0xff]
                %2226 = vst [vmem:[%s2208 + $0x100] sm:$0xff] %v2225
                %v2227 = vld [vmem:[%s2207 + $0x48] sm:$0xff]
                %2228 = vst [vmem:[%s2208 + $0x108] sm:$0xff] %v2227
                %v2229 = vld [vmem:[%s2207 + $0x50] sm:$0xff]
                %2230 = vst [vmem:[%s2208 + $0x110] sm:$0xff] %v2229
                %v2231 = vld [vmem:[%s2207 + $0x58] sm:$0xff]
                %2232 = vst [vmem:[%s2208 + $0x118] sm:$0xff] %v2231
                %v2233 = vld [vmem:[%s2207 + $0x60] sm:$0xff]
                %2234 = vst [vmem:[%s2208 + $0x180] sm:$0xff] %v2233
                %v2235 = vld [vmem:[%s2207 + $0x68] sm:$0xff]
                %2236 = vst [vmem:[%s2208 + $0x188] sm:$0xff] %v2235
                %v2237 = vld [vmem:[%s2207 + $0x70] sm:$0xff]
                %2238 = vst [vmem:[%s2208 + $0x190] sm:$0xff] %v2237
                %v2239 = vld [vmem:[%s2207 + $0x78] sm:$0xff]
                %2240 = vst [vmem:[%s2208 + $0x198] sm:$0xff] %v2239
              $region81: #{conv2plus1d_forward.1} parent=75 // loop_footer
                %s2206 = sadd.s32 1, %s2202
              $region82: #{conv2plus1d_forward.1} parent=75 // loop_footer_branch
                %2201 = sbr.rel target = $region78
              $region83: #{conv2plus1d_forward.1} parent=75 // loop_exit
                _
            $region76: #{conv2plus1d_forward.1} parent=71 // pred_fallthru
              _
            // Predicated region
            $region84: #{conv2plus1d_forward.1} parent=71 // pred_check
              _
            $region85: #{conv2plus1d_forward.1} parent=71 // pred_check_branch
              %2242 = sbr.rel target = $region87
            $region86: #{conv2plus1d_forward.1} parent=71 // pred_region
              _
            $region87: #{conv2plus1d_forward.1} parent=71 // pred_fallthru
              _
          $region72: #{conv2plus1d_forward.1} parent=67 // pred_fallthru
            _
          %2243 = vnop
        $region68: #{conv2plus1d_forward.1} parent=39 // pred_fallthru
          _
      $region40: #{conv2plus1d_forward.1} parent=5 // pred_fallthru
        _
      %p2244 = scmp.le.s32.totalorder 2, %s15
      // Predicated region
      $region88: #{conv2plus1d_forward.1} parent=5 // pred_check
        %p2245 = pneg %p2244
      $region89: #{conv2plus1d_forward.1} parent=5 // pred_check_branch
        %2247 = sbr.rel (%p2245) target = $region91
      $region90: #{conv2plus1d_forward.1} parent=5 // pred_region
        %s2248 = ssub.s32 %s15, 2
        // Predicated region
        $region92: #{conv2plus1d_forward.1} parent=90 // pred_check
          %p2249 = pneg %p173
        $region93: #{conv2plus1d_forward.1} parent=90 // pred_check_branch
          %2251 = sbr.rel (%p2249) target = $region95
        $region94: #{conv2plus1d_forward.1} parent=90 // pred_region
          %s2252 = sand.u32 %s158, 1
          %s2253 = sand.u32 %s158, 1
          %s2254 = smul.addr %s2253, 128
          %s2255 = scalar_lea.vmem [#allocation10], %s2254
        $region95: #{conv2plus1d_forward.1} parent=90 // pred_fallthru
          _
      $region91: #{conv2plus1d_forward.1} parent=5 // pred_fallthru
        _
    $region6: #{conv2plus1d_forward.1} parent=1 // loop_footer
      %s19 = sadd.s32 1, %s15
    $region7: #{conv2plus1d_forward.1} parent=1 // loop_footer_branch
      %14 = sbr.rel target = $region3
    $region8: #{conv2plus1d_forward.1} parent=1 // loop_exit
      _
    %2256 = vsyncpa [#allocation7], 1
    %s2257 = scalar_lea.sflag [#allocation7], 1
    %2258 = vsyncpa %s2257, 1
    %2259 = vsyncpa [#allocation9], 1
    %s2260 = scalar_lea.sflag [#allocation9], 1
    %2261 = vsyncpa %s2260, 1

</llo_original>
